<compile_context>
chip_gen: v5e
topology: v5e:2x2
jax: 0.10.0
libtpu: 0.0.40
codegen_flags: <defaults>
</compile_context>

<pallas_src>
import functools

import numpy as np
import jax
import jax.numpy as jnp
from jax import lax
from jax.experimental import pallas as pl
from jax.experimental.pallas import tpu as pltpu


_NEG = -1.0e30  # plain Python float -> becomes a jaxpr literal, never a const


def _round_up(x, m):
    return ((x + m - 1) // m) * m


@functools.lru_cache(maxsize=1)
def _vmem_limit_bytes():
    # 0.8x physical per-core VMEM: ~51 MiB on v7x (64 MiB), ~102 MiB on
    # v5e/v6e (128 MiB).  Fallback is safe on every generation.
    try:
        cap = int(pltpu.get_tpu_info().vmem_capacity_bytes)
    except Exception:
        cap = 64 * 1024 * 1024
    return int(0.8 * cap)


# ----------------------------------------------------------------------------
# Fused kernel: one row-tile of the batch against the whole concatenated
# camera memory.  feat is pre-scaled by 1/beta host-side, so per row k:
#   scaled = feat_k @ tempV.T                                        (1, M)
#   CE_k   = logsumexp(scaled[cam window]) - scaled[target column]
#   pos    = columns whose class id == pseudo label of row k
#   sel    = pos  ∪  top-bg_knn of the remaining (negative) columns
#   A_k    = logsumexp(scaled[sel]) - mean(scaled[pos])
#   out_k  = w_ce[k] * CE_k + w_assoc[k] * A_k
# ----------------------------------------------------------------------------
def _cap_loss_kernel(feat_ref, tempvt_ref, cls_ref, meta_i_ref, meta_f_ref,
                     out_ref, *, inv_beta, bg_knn, n_bisect, compute_assoc,
                     m_real):
    feat = feat_ref[...]                          # (TB, D)  bf16, pre /beta
    tempvt = tempvt_ref[...]                      # (D,  M)  bf16
    scaled = jnp.dot(feat, tempvt,
                     preferred_element_type=jnp.float32)             # (TB, M)

    tb, m_cols = scaled.shape
    col = lax.broadcasted_iota(jnp.int32, (tb, m_cols), 1)

    meta_i = meta_i_ref[...]                      # (TB, 4) int32
    target_col = meta_i[:, 0:1]
    cam_off = meta_i[:, 1:2]
    cam_end = meta_i[:, 2:3]
    pseudo_tgt = meta_i[:, 3:4]
    meta_f = meta_f_ref[...]                      # (TB, 2) f32
    w_ce = meta_f[:, 0:1]
    w_assoc = meta_f[:, 1:2]

    in_cam = (col >= cam_off) & (col < cam_end)
    tgt_logit = jnp.sum(jnp.where(col == target_col, scaled, 0.0),
                        axis=-1, keepdims=True)

    if not compute_assoc:
        # ---- intra-camera cross entropy only (window-local max) ----
        cam_vals = jnp.where(in_cam, scaled, _NEG)
        m_cam = jnp.max(cam_vals, axis=-1, keepdims=True)
        se_cam = jnp.sum(jnp.exp(cam_vals - m_cam), axis=-1, keepdims=True)
        lse_cam = m_cam + jnp.log(se_cam)
        out_ref[...] = w_ce * (lse_cam - tgt_logit)
        return

    # ---- shared exp pass (global max shift); reused by CE and associate ----
    # Safe because features / memory are L2-normalized: |scaled| <= 1/beta,
    # so exp(scaled - m_all) >= exp(-2/beta) stays far above f32 underflow.
    m_all = jnp.max(scaled, axis=-1, keepdims=True)
    exp_all = jnp.exp(scaled - m_all)

    se_cam = jnp.sum(jnp.where(in_cam, exp_all, 0.0), axis=-1, keepdims=True)
    lse_cam = m_all + jnp.log(se_cam)
    loss_row = w_ce * (lse_cam - tgt_logit)

    # ---- cross-camera associate loss ----
    cls = cls_ref[...]                            # (1, M) int32 (-2 = padding)
    pos = cls == pseudo_tgt                       # (TB, M) bool

    sum_exp_pos = jnp.sum(jnp.where(pos, exp_all, 0.0), axis=-1, keepdims=True)
    pos_cnt = jnp.sum(jnp.where(pos, 1.0, 0.0), axis=-1, keepdims=True)
    pos_sum = jnp.sum(jnp.where(pos, scaled, 0.0), axis=-1, keepdims=True)
    pos_mean = pos_sum / jnp.maximum(pos_cnt, 1.0)    # exact reciprocal

    # Negative pool: everything that is not a positive and not a padded column.
    if m_real < m_cols:
        neg_mask = pos | (col >= m_real)
    else:
        neg_mask = pos
    neg = jnp.where(neg_mask, _NEG, scaled)

    # top-bg_knn negatives via value bisection for the k-th largest — no
    # full-width writebacks; ties handled like torch.topk; degrades gracefully
    # when fewer than bg_knn negatives exist.  Analytic bounds (unit-norm
    # inputs): scaled in [-1/beta, 1/beta].
    kf = float(bg_knn)
    lo0 = jnp.full_like(m_all, -inv_beta - 1.0)
    hi0 = m_all + 1.0

    def bisect(_, carry):
        lo, hi = carry
        mid = 0.5 * (lo + hi)
        cnt = jnp.sum(jnp.where(neg >= mid, 1.0, 0.0), axis=-1, keepdims=True)
        ok = cnt >= kf
        return jnp.where(ok, mid, lo), jnp.where(ok, hi, mid)

    thr, _ = lax.fori_loop(0, n_bisect, bisect, (lo0, hi0), unroll=True)

    gt = neg > thr
    cnt_gt = jnp.sum(jnp.where(gt, 1.0, 0.0), axis=-1, keepdims=True)
    cnt_ge = jnp.sum(jnp.where(neg >= thr, 1.0, 0.0), axis=-1, keepdims=True)
    cnt_eq = cnt_ge - cnt_gt
    sum_exp_gt = jnp.sum(jnp.where(gt, exp_all, 0.0), axis=-1, keepdims=True)
    n_at_thr = jnp.clip(kf - cnt_gt, 0.0, cnt_eq)     # tie-aware, degrades
    sum_exp_neg = sum_exp_gt + n_at_thr * jnp.exp(thr - m_all)

    lse_sel = m_all + jnp.log(sum_exp_pos + sum_exp_neg)
    loss_row = loss_row + w_assoc * (lse_sel - pos_mean)

    out_ref[...] = loss_row                       # (TB, 1)


def cap_fused_loss(features, tempv_t, class_ids, meta_i, meta_f, *, beta,
                   bg_knn, compute_assoc, m_real, n_bisect=22):
    """Single fused pallas_call over row tiles of the batch."""
    B, D = features.shape
    M = tempv_t.shape[1]

    # Row tile: multiple of 8 sublanes, sized so the row grid has >= 2 steps
    # (keeps both v7x TensorCores busy; gives the pipeliner steps to overlap
    # the small feat/meta DMAs with compute).
    TB = min(128, _round_up(max(1, B // 4), 8))
    B_pad = _round_up(B, TB)
    pad = B_pad - B

    # Fold the 1/beta logit scale into the host-side bf16 cast (O(B*D))
    # instead of an O(TB*M) VALU multiply in the kernel.
    feat = (jnp.asarray(features, jnp.float32) * (1.0 / beta)).astype(jnp.bfloat16)
    feat = jnp.pad(feat, ((0, pad), (0, 0)))

    # Padded rows: camera window [0,1) keeps lse finite, pseudo label -1 never
    # matches a class id, both weights are zero -> contribute exactly 0.
    meta_i = jnp.concatenate(
        [jnp.asarray(meta_i, jnp.int32),
         jnp.broadcast_to(jnp.asarray([0, 0, 1, -1], jnp.int32), (pad, 4))],
        axis=0)
    meta_f = jnp.concatenate(
        [jnp.asarray(meta_f, jnp.float32), jnp.zeros((pad, 2), jnp.float32)],
        axis=0)

    kernel = functools.partial(
        _cap_loss_kernel, inv_beta=float(1.0 / beta), bg_knn=int(bg_knn),
        n_bisect=int(n_bisect), compute_assoc=bool(compute_assoc),
        m_real=int(m_real))

    def build(single_buffer_invariants):
        if single_buffer_invariants:
            # Grid-invariant operands: single-buffered (halves their VMEM).
            mem_spec = pl.BlockSpec((D, M), lambda i: (0, 0),
                                    pipeline_mode=pl.Buffered(1))
            cls_spec = pl.BlockSpec((1, M), lambda i: (0, 0),
                                    pipeline_mode=pl.Buffered(1))
        else:
            mem_spec = pl.BlockSpec((D, M), lambda i: (0, 0))
            cls_spec = pl.BlockSpec((1, M), lambda i: (0, 0))
        return pl.pallas_call(
            kernel,
            out_shape=jax.ShapeDtypeStruct((B_pad, 1), jnp.float32),
            grid=(B_pad // TB,),
            in_specs=[
                pl.BlockSpec((TB, D), lambda i: (i, 0)),   # features (row tile)
                mem_spec,                                  # concatenated memory^T
                cls_spec,                                  # class ids
                pl.BlockSpec((TB, 4), lambda i: (i, 0)),   # int row metadata
                pl.BlockSpec((TB, 2), lambda i: (i, 0)),   # per-row loss weights
            ],
            out_specs=pl.BlockSpec((TB, 1), lambda i: (i, 0)),
            compiler_params=pltpu.CompilerParams(
                dimension_semantics=("parallel",),
                vmem_limit_bytes=_vmem_limit_bytes()),
        )

    args = (feat, tempv_t, class_ids, meta_i, meta_f)
    try:
        row_losses = build(True)(*args)
    except Exception:
        # Fallback if pipeline_mode=pl.Buffered(1) is rejected by this build.
        row_losses = build(False)(*args)
    return jnp.sum(row_losses)


# ----------------------------------------------------------------------------
# Host-side CAPMemory (forward-pass semantics of the PyTorch module).
# ----------------------------------------------------------------------------
class CAPMemoryPallas:
    def __init__(self, beta=0.05, alpha=0.01, all_img_cams=None,
                 crosscam_epoch=5, bg_knn=50):
        self.beta = float(beta)
        self.alpha = float(alpha)
        self.all_img_cams = np.asarray(all_img_cams)
        self.unique_cams = np.unique(self.all_img_cams)
        self.crosscam_epoch = crosscam_epoch
        self.bg_knn = bg_knn

        self.percam_memory = []
        self.memory_class_mapper = []
        self.concate_intra_class = None
        self._cam_index = {}
        self._cam_off = {}
        self._tempv_t = None      # (D, M_pad) bf16 concatenated proxy memory^T
        self._class_ids = None    # (1, M_pad) int32 (-2 for padded columns)
        self._m_real = 0

    def _rebuild(self, all_pseudo_label, init_intra_id_feat):
        self.percam_memory = []
        self.memory_class_mapper = []
        concat = []
        for cc in self.unique_cams:
            percam_ind = np.nonzero(self.all_img_cams == cc)[0]
            uniq_class = np.unique(all_pseudo_label[percam_ind])
            uniq_class = uniq_class[uniq_class >= 0]
            concat.append(uniq_class)
            self.memory_class_mapper.append(
                {int(uniq_class[j]): j for j in range(len(uniq_class))})
            if len(init_intra_id_feat) > 0:
                self.percam_memory.append(
                    jnp.asarray(init_intra_id_feat[int(cc)], jnp.float32))
        self.concate_intra_class = np.concatenate(concat)

        self._cam_index = {int(cc): i for i, cc in enumerate(self.unique_cams)}
        self._cam_off = {}
        off = 0
        for i, cc in enumerate(self.unique_cams):
            n = int(self.percam_memory[i].shape[0])
            self._cam_off[int(cc)] = (off, n)
            off += n

        # Concatenated memory, transposed once host-side, padded to a lane-dense
        # multiple of 128 columns, kept bf16.
        # TODO(synk): if the exemplar-memory in-place update (PyTorch autograd
        # backward) is ever ported, this cached tensor must be rebuilt after it.
        tempv_t = jnp.concatenate([m.T for m in self.percam_memory], axis=1)
        m_real = int(tempv_t.shape[1])
        m_pad = _round_up(m_real, 128)
        if m_pad > m_real:
            tempv_t = jnp.pad(tempv_t, ((0, 0), (0, m_pad - m_real)))
        self._tempv_t = tempv_t.astype(jnp.bfloat16)

        cls_ids = np.full((1, m_pad), -2, np.int32)   # -2 never matches a label
        cls_ids[0, :m_real] = self.concate_intra_class.astype(np.int32)
        self._class_ids = jnp.asarray(cls_ids)
        self._m_real = m_real

    def forward(self, features, targets, cams=None, epoch=None,
                all_pseudo_label=None, batch_ind=-1, init_intra_id_feat=None):
        targets = np.asarray(targets)
        cams = np.asarray(cams)
        all_pseudo_label = np.asarray(all_pseudo_label)

        if batch_ind == 0:
            self._rebuild(all_pseudo_label, init_intra_id_feat)

        compute_assoc = bool(epoch >= self.crosscam_epoch)
        B = int(features.shape[0])
        batch_pseudo = all_pseudo_label[targets]

        # Per-row metadata (cheap host numpy on B elements).
        meta_i = np.zeros((B, 4), np.int32)
        meta_f = np.zeros((B, 2), np.float32)
        for cc in np.unique(cams):
            rows = np.nonzero(cams == cc)[0]
            n_cc = len(rows)
            off, n_mem = self._cam_off[int(cc)]
            mapper = self.memory_class_mapper[self._cam_index[int(cc)]]
            mapped = np.array([mapper[int(t)] for t in batch_pseudo[rows]],
                              np.int32)
            meta_i[rows, 0] = off + mapped            # CE target column
            meta_i[rows, 1] = off                     # camera window start
            meta_i[rows, 2] = off + n_mem             # camera window end
            meta_i[rows, 3] = batch_pseudo[rows].astype(np.int32)
            meta_f[rows, 0] = 1.0 / n_cc              # CE weight (per-cam mean)
            meta_f[rows, 1] = (0.5 / n_cc) if compute_assoc else 0.0

        total = cap_fused_loss(
            jnp.asarray(features, jnp.float32), self._tempv_t, self._class_ids,
            meta_i, meta_f, beta=self.beta, bg_knn=self.bg_knn,
            compute_assoc=compute_assoc, m_real=self._m_real)
        # TODO(synk): the exemplar-memory update (em[y]=a*em[y]+(1-a)*x, renorm)
        # lives in the PyTorch autograd *backward* and is intentionally omitted.
        return jnp.reshape(total, (1,))


# ----------------------------------------------------------------------------
# Deterministic synthetic example.
# ----------------------------------------------------------------------------
if __name__ == "__main__":
    N_DATA, N_CLS, D, B = 128, 40, 128, 16

    # dataset metadata: 2 cameras, each camera sees all 40 pseudo classes
    all_img_cams = (np.arange(N_DATA) % 2).astype(np.int64)
    all_pseudo_label = ((np.arange(N_DATA) // 2) % N_CLS).astype(np.int64)

    key = jax.random.PRNGKey(0)
    k1, k2, k3 = jax.random.split(key, 3)

    features = jax.random.normal(k1, (B, D), jnp.float32)
    features = features / jnp.linalg.norm(features, axis=1, keepdims=True)

    targets = np.asarray(jax.random.choice(k2, N_DATA, (B,), replace=False))
    cams = all_img_cams[targets]

    init_intra_id_feat = []
    for cc in range(2):
        uniq = np.unique(all_pseudo_label[all_img_cams == cc])
        f = jax.random.normal(jax.random.fold_in(k3, cc), (len(uniq), D),
                              jnp.float32)
        f = f / jnp.linalg.norm(f, axis=1, keepdims=True)
        init_intra_id_feat.append(f)

    cap = CAPMemoryPallas(beta=0.05, alpha=0.01, all_img_cams=all_img_cams,
                          crosscam_epoch=5, bg_knn=50)
    loss = cap.forward(features, targets, cams=cams, epoch=5,
                       all_pseudo_label=all_pseudo_label, batch_ind=0,
                       init_intra_id_feat=init_intra_id_feat)
    jax.block_until_ready(loss)
    print("KERNEL_OK")
</pallas_src>

<mosaic_0001>
module attributes {stable_mosaic.version = 11 : i64} {
  func.func @_cap_loss_kernel(%arg0: i32, %arg1: memref<8x128xbf16, #tpu.memory_space<vmem>>, %arg2: memref<128x128xbf16, #tpu.memory_space<vmem>>, %arg3: memref<1x128xi32, #tpu.memory_space<vmem>>, %arg4: memref<8x4xi32, #tpu.memory_space<vmem>>, %arg5: memref<8x2xf32, #tpu.memory_space<vmem>>, %arg6: memref<8x1xf32, #tpu.memory_space<vmem>>) attributes {dimension_semantics = [#tpu.dimension_semantics<parallel>], iteration_bounds = array<i64: 2>, scalar_prefetch = 0 : i64, scratch_operands = 0 : i64, tpu.core_type = #tpu.core_type<tc>, window_params = [{transform_indices = @transform_0, window_bounds = array<i64: 8, 128>}, {pipeline_mode = #tpu.pipeline_mode<synchronous>, transform_indices = @transform_1, window_bounds = array<i64: 128, 128>}, {pipeline_mode = #tpu.pipeline_mode<synchronous>, transform_indices = @transform_2, window_bounds = array<i64: 1, 128>}, {transform_indices = @transform_3, window_bounds = array<i64: 8, 4>}, {transform_indices = @transform_4, window_bounds = array<i64: 8, 2>}, {transform_indices = @transform_5, window_bounds = array<i64: 8, 1>}]} {
    %c0 = arith.constant 0 : index
    %c0_0 = arith.constant 0 : index
    %0 = vector.load %arg1[%c0, %c0_0] : memref<8x128xbf16, #tpu.memory_space<vmem>>, vector<8x128xbf16>
    %c0_1 = arith.constant 0 : index
    %c0_2 = arith.constant 0 : index
    %1 = vector.load %arg2[%c0_1, %c0_2] : memref<128x128xbf16, #tpu.memory_space<vmem>>, vector<128x128xbf16>
    %cst = arith.constant dense<0.000000e+00> : vector<8x128xf32>
    %2 = tpu.matmul %0, %1, %cst {dimension_numbers = #tpu.dot_dimension_numbers<[1], [0], [0], [1], [0, 0, 1, 1], [], []>} : vector<8x128xbf16>, vector<128x128xbf16>, vector<8x128xf32> -> vector<8x128xf32>
    %3 = tpu.iota {dimensions = array<i32: 1>} : vector<8x128xi32>
    %c0_3 = arith.constant 0 : index
    %c0_4 = arith.constant 0 : index
    %4 = vector.load %arg4[%c0_3, %c0_4] : memref<8x4xi32, #tpu.memory_space<vmem>>, vector<8x4xi32>
    %5 = vector.extract_strided_slice %4 {offsets = [0, 0], sizes = [8, 1], strides = [1, 1]} : vector<8x4xi32> to vector<8x1xi32>
    %6 = vector.extract_strided_slice %4 {offsets = [0, 1], sizes = [8, 1], strides = [1, 1]} : vector<8x4xi32> to vector<8x1xi32>
    %7 = vector.extract_strided_slice %4 {offsets = [0, 2], sizes = [8, 1], strides = [1, 1]} : vector<8x4xi32> to vector<8x1xi32>
    %8 = vector.extract_strided_slice %4 {offsets = [0, 3], sizes = [8, 1], strides = [1, 1]} : vector<8x4xi32> to vector<8x1xi32>
    %c0_5 = arith.constant 0 : index
    %c0_6 = arith.constant 0 : index
    %9 = vector.load %arg5[%c0_5, %c0_6] : memref<8x2xf32, #tpu.memory_space<vmem>>, vector<8x2xf32>
    %10 = vector.extract_strided_slice %9 {offsets = [0, 0], sizes = [8, 1], strides = [1, 1]} : vector<8x2xf32> to vector<8x1xf32>
    %11 = vector.extract_strided_slice %9 {offsets = [0, 1], sizes = [8, 1], strides = [1, 1]} : vector<8x2xf32> to vector<8x1xf32>
    %12 = vector.broadcast %6 : vector<8x1xi32> to vector<8x128xi32>
    %13 = arith.cmpi sge, %3, %12 : vector<8x128xi32>
    %14 = vector.broadcast %7 : vector<8x1xi32> to vector<8x128xi32>
    %15 = arith.cmpi slt, %3, %14 : vector<8x128xi32>
    %16 = arith.andi %13, %15 : vector<8x128xi1>
    %17 = vector.broadcast %5 : vector<8x1xi32> to vector<8x128xi32>
    %18 = arith.cmpi eq, %3, %17 : vector<8x128xi32>
    %cst_7 = arith.constant 0.000000e+00 : f32
    %19 = vector.broadcast %cst_7 : f32 to vector<8x128xf32>
    %20 = arith.select %18, %2, %19 : vector<8x128xi1>, vector<8x128xf32>
    %cst_8 = arith.constant dense<0.000000e+00> : vector<8xf32>
    %21 = vector.multi_reduction <add>, %20, %cst_8 [1] : vector<8x128xf32> to vector<8xf32>
    %22 = vector.shape_cast %21 : vector<8xf32> to vector<8x1xf32>
    %cst_9 = arith.constant dense<0xFF800000> : vector<8xf32>
    %23 = vector.multi_reduction <maximumf>, %2, %cst_9 [1] : vector<8x128xf32> to vector<8xf32>
    %24 = vector.shape_cast %23 : vector<8xf32> to vector<8x1xf32>
    %25 = vector.broadcast %24 : vector<8x1xf32> to vector<8x128xf32>
    %26 = arith.subf %2, %25 : vector<8x128xf32>
    %27 = math.exp %26 : vector<8x128xf32>
    %cst_10 = arith.constant 0.000000e+00 : f32
    %28 = vector.broadcast %cst_10 : f32 to vector<8x128xf32>
    %29 = arith.select %16, %27, %28 : vector<8x128xi1>, vector<8x128xf32>
    %cst_11 = arith.constant dense<0.000000e+00> : vector<8xf32>
    %30 = vector.multi_reduction <add>, %29, %cst_11 [1] : vector<8x128xf32> to vector<8xf32>
    %31 = vector.shape_cast %30 : vector<8xf32> to vector<8x1xf32>
    %32 = math.log %31 : vector<8x1xf32>
    %33 = arith.addf %24, %32 : vector<8x1xf32>
    %34 = arith.subf %33, %22 : vector<8x1xf32>
    %35 = arith.mulf %10, %34 : vector<8x1xf32>
    %c0_12 = arith.constant 0 : index
    %c0_13 = arith.constant 0 : index
    %36 = vector.load %arg3[%c0_12, %c0_13] : memref<1x128xi32, #tpu.memory_space<vmem>>, vector<1x128xi32>
    %37 = vector.broadcast %36 : vector<1x128xi32> to vector<8x128xi32>
    %38 = vector.broadcast %8 : vector<8x1xi32> to vector<8x128xi32>
    %39 = arith.cmpi eq, %37, %38 : vector<8x128xi32>
    %cst_14 = arith.constant 0.000000e+00 : f32
    %40 = vector.broadcast %cst_14 : f32 to vector<8x128xf32>
    %41 = arith.select %39, %27, %40 : vector<8x128xi1>, vector<8x128xf32>
    %cst_15 = arith.constant dense<0.000000e+00> : vector<8xf32>
    %42 = vector.multi_reduction <add>, %41, %cst_15 [1] : vector<8x128xf32> to vector<8xf32>
    %43 = vector.shape_cast %42 : vector<8xf32> to vector<8x1xf32>
    %cst_16 = arith.constant 1.000000e+00 : f32
    %cst_17 = arith.constant 0.000000e+00 : f32
    %44 = vector.broadcast %cst_16 : f32 to vector<8x128xf32>
    %45 = vector.broadcast %cst_17 : f32 to vector<8x128xf32>
    %46 = arith.select %39, %44, %45 : vector<8x128xi1>, vector<8x128xf32>
    %cst_18 = arith.constant dense<0.000000e+00> : vector<8xf32>
    %47 = vector.multi_reduction <add>, %46, %cst_18 [1] : vector<8x128xf32> to vector<8xf32>
    %48 = vector.shape_cast %47 : vector<8xf32> to vector<8x1xf32>
    %cst_19 = arith.constant 0.000000e+00 : f32
    %49 = vector.broadcast %cst_19 : f32 to vector<8x128xf32>
    %50 = arith.select %39, %2, %49 : vector<8x128xi1>, vector<8x128xf32>
    %cst_20 = arith.constant dense<0.000000e+00> : vector<8xf32>
    %51 = vector.multi_reduction <add>, %50, %cst_20 [1] : vector<8x128xf32> to vector<8xf32>
    %52 = vector.shape_cast %51 : vector<8xf32> to vector<8x1xf32>
    %cst_21 = arith.constant 1.000000e+00 : f32
    %53 = vector.broadcast %cst_21 : f32 to vector<8x1xf32>
    %54 = arith.maximumf %48, %53 : vector<8x1xf32>
    %55 = arith.divf %52, %54 : vector<8x1xf32>
    %c80_i32 = arith.constant 80 : i32
    %56 = vector.broadcast %c80_i32 : i32 to vector<8x128xi32>
    %57 = arith.cmpi sge, %3, %56 : vector<8x128xi32>
    %58 = arith.ori %39, %57 : vector<8x128xi1>
    %cst_22 = arith.constant -1.000000e+30 : f32
    %59 = vector.broadcast %cst_22 : f32 to vector<8x128xf32>
    %60 = arith.select %58, %59, %2 : vector<8x128xi1>, vector<8x128xf32>
    %cst_23 = arith.constant -2.100000e+01 : f32
    %61 = vector.broadcast %cst_23 : f32 to vector<8x1xf32>
    %cst_24 = arith.constant 1.000000e+00 : f32
    %62 = vector.broadcast %cst_24 : f32 to vector<8x1xf32>
    %63 = arith.addf %24, %62 : vector<8x1xf32>
    %c0_i32 = arith.constant 0 : i32
    %64 = arith.addf %61, %63 : vector<8x1xf32>
    %cst_25 = arith.constant 5.000000e-01 : f32
    %65 = vector.broadcast %cst_25 : f32 to vector<8x1xf32>
    %66 = arith.mulf %65, %64 : vector<8x1xf32>
    %67 = vector.broadcast %66 : vector<8x1xf32> to vector<8x128xf32>
    %68 = arith.cmpf oge, %60, %67 : vector<8x128xf32>
    %cst_26 = arith.constant 1.000000e+00 : f32
    %cst_27 = arith.constant 0.000000e+00 : f32
    %69 = vector.broadcast %cst_26 : f32 to vector<8x128xf32>
    %70 = vector.broadcast %cst_27 : f32 to vector<8x128xf32>
    %71 = arith.select %68, %69, %70 : vector<8x128xi1>, vector<8x128xf32>
    %cst_28 = arith.constant dense<0.000000e+00> : vector<8xf32>
    %72 = vector.multi_reduction <add>, %71, %cst_28 [1] : vector<8x128xf32> to vector<8xf32>
    %73 = vector.shape_cast %72 : vector<8xf32> to vector<8x1xf32>
    %cst_29 = arith.constant 5.000000e+01 : f32
    %74 = vector.broadcast %cst_29 : f32 to vector<8x1xf32>
    %75 = arith.cmpf oge, %73, %74 : vector<8x1xf32>
    %76 = arith.select %75, %66, %61 : vector<8x1xi1>, vector<8x1xf32>
    %77 = arith.select %75, %63, %66 : vector<8x1xi1>, vector<8x1xf32>
    %c1_i32 = arith.constant 1 : i32
    %78 = arith.addf %76, %77 : vector<8x1xf32>
    %cst_30 = arith.constant 5.000000e-01 : f32
    %79 = vector.broadcast %cst_30 : f32 to vector<8x1xf32>
    %80 = arith.mulf %79, %78 : vector<8x1xf32>
    %81 = vector.broadcast %80 : vector<8x1xf32> to vector<8x128xf32>
    %82 = arith.cmpf oge, %60, %81 : vector<8x128xf32>
    %cst_31 = arith.constant 1.000000e+00 : f32
    %cst_32 = arith.constant 0.000000e+00 : f32
    %83 = vector.broadcast %cst_31 : f32 to vector<8x128xf32>
    %84 = vector.broadcast %cst_32 : f32 to vector<8x128xf32>
    %85 = arith.select %82, %83, %84 : vector<8x128xi1>, vector<8x128xf32>
    %cst_33 = arith.constant dense<0.000000e+00> : vector<8xf32>
    %86 = vector.multi_reduction <add>, %85, %cst_33 [1] : vector<8x128xf32> to vector<8xf32>
    %87 = vector.shape_cast %86 : vector<8xf32> to vector<8x1xf32>
    %cst_34 = arith.constant 5.000000e+01 : f32
    %88 = vector.broadcast %cst_34 : f32 to vector<8x1xf32>
    %89 = arith.cmpf oge, %87, %88 : vector<8x1xf32>
    %90 = arith.select %89, %80, %76 : vector<8x1xi1>, vector<8x1xf32>
    %91 = arith.select %89, %77, %80 : vector<8x1xi1>, vector<8x1xf32>
    %c2_i32 = arith.constant 2 : i32
    %92 = arith.addf %90, %91 : vector<8x1xf32>
    %cst_35 = arith.constant 5.000000e-01 : f32
    %93 = vector.broadcast %cst_35 : f32 to vector<8x1xf32>
    %94 = arith.mulf %93, %92 : vector<8x1xf32>
    %95 = vector.broadcast %94 : vector<8x1xf32> to vector<8x128xf32>
    %96 = arith.cmpf oge, %60, %95 : vector<8x128xf32>
    %cst_36 = arith.constant 1.000000e+00 : f32
    %cst_37 = arith.constant 0.000000e+00 : f32
    %97 = vector.broadcast %cst_36 : f32 to vector<8x128xf32>
    %98 = vector.broadcast %cst_37 : f32 to vector<8x128xf32>
    %99 = arith.select %96, %97, %98 : vector<8x128xi1>, vector<8x128xf32>
    %cst_38 = arith.constant dense<0.000000e+00> : vector<8xf32>
    %100 = vector.multi_reduction <add>, %99, %cst_38 [1] : vector<8x128xf32> to vector<8xf32>
    %101 = vector.shape_cast %100 : vector<8xf32> to vector<8x1xf32>
    %cst_39 = arith.constant 5.000000e+01 : f32
    %102 = vector.broadcast %cst_39 : f32 to vector<8x1xf32>
    %103 = arith.cmpf oge, %101, %102 : vector<8x1xf32>
    %104 = arith.select %103, %94, %90 : vector<8x1xi1>, vector<8x1xf32>
    %105 = arith.select %103, %91, %94 : vector<8x1xi1>, vector<8x1xf32>
    %c3_i32 = arith.constant 3 : i32
    %106 = arith.addf %104, %105 : vector<8x1xf32>
    %cst_40 = arith.constant 5.000000e-01 : f32
    %107 = vector.broadcast %cst_40 : f32 to vector<8x1xf32>
    %108 = arith.mulf %107, %106 : vector<8x1xf32>
    %109 = vector.broadcast %108 : vector<8x1xf32> to vector<8x128xf32>
    %110 = arith.cmpf oge, %60, %109 : vector<8x128xf32>
    %cst_41 = arith.constant 1.000000e+00 : f32
    %cst_42 = arith.constant 0.000000e+00 : f32
    %111 = vector.broadcast %cst_41 : f32 to vector<8x128xf32>
    %112 = vector.broadcast %cst_42 : f32 to vector<8x128xf32>
    %113 = arith.select %110, %111, %112 : vector<8x128xi1>, vector<8x128xf32>
    %cst_43 = arith.constant dense<0.000000e+00> : vector<8xf32>
    %114 = vector.multi_reduction <add>, %113, %cst_43 [1] : vector<8x128xf32> to vector<8xf32>
    %115 = vector.shape_cast %114 : vector<8xf32> to vector<8x1xf32>
    %cst_44 = arith.constant 5.000000e+01 : f32
    %116 = vector.broadcast %cst_44 : f32 to vector<8x1xf32>
    %117 = arith.cmpf oge, %115, %116 : vector<8x1xf32>
    %118 = arith.select %117, %108, %104 : vector<8x1xi1>, vector<8x1xf32>
    %119 = arith.select %117, %105, %108 : vector<8x1xi1>, vector<8x1xf32>
    %c4_i32 = arith.constant 4 : i32
    %120 = arith.addf %118, %119 : vector<8x1xf32>
    %cst_45 = arith.constant 5.000000e-01 : f32
    %121 = vector.broadcast %cst_45 : f32 to vector<8x1xf32>
    %122 = arith.mulf %121, %120 : vector<8x1xf32>
    %123 = vector.broadcast %122 : vector<8x1xf32> to vector<8x128xf32>
    %124 = arith.cmpf oge, %60, %123 : vector<8x128xf32>
    %cst_46 = arith.constant 1.000000e+00 : f32
    %cst_47 = arith.constant 0.000000e+00 : f32
    %125 = vector.broadcast %cst_46 : f32 to vector<8x128xf32>
    %126 = vector.broadcast %cst_47 : f32 to vector<8x128xf32>
    %127 = arith.select %124, %125, %126 : vector<8x128xi1>, vector<8x128xf32>
    %cst_48 = arith.constant dense<0.000000e+00> : vector<8xf32>
    %128 = vector.multi_reduction <add>, %127, %cst_48 [1] : vector<8x128xf32> to vector<8xf32>
    %129 = vector.shape_cast %128 : vector<8xf32> to vector<8x1xf32>
    %cst_49 = arith.constant 5.000000e+01 : f32
    %130 = vector.broadcast %cst_49 : f32 to vector<8x1xf32>
    %131 = arith.cmpf oge, %129, %130 : vector<8x1xf32>
    %132 = arith.select %131, %122, %118 : vector<8x1xi1>, vector<8x1xf32>
    %133 = arith.select %131, %119, %122 : vector<8x1xi1>, vector<8x1xf32>
    %c5_i32 = arith.constant 5 : i32
    %134 = arith.addf %132, %133 : vector<8x1xf32>
    %cst_50 = arith.constant 5.000000e-01 : f32
    %135 = vector.broadcast %cst_50 : f32 to vector<8x1xf32>
    %136 = arith.mulf %135, %134 : vector<8x1xf32>
    %137 = vector.broadcast %136 : vector<8x1xf32> to vector<8x128xf32>
    %138 = arith.cmpf oge, %60, %137 : vector<8x128xf32>
    %cst_51 = arith.constant 1.000000e+00 : f32
    %cst_52 = arith.constant 0.000000e+00 : f32
    %139 = vector.broadcast %cst_51 : f32 to vector<8x128xf32>
    %140 = vector.broadcast %cst_52 : f32 to vector<8x128xf32>
    %141 = arith.select %138, %139, %140 : vector<8x128xi1>, vector<8x128xf32>
    %cst_53 = arith.constant dense<0.000000e+00> : vector<8xf32>
    %142 = vector.multi_reduction <add>, %141, %cst_53 [1] : vector<8x128xf32> to vector<8xf32>
    %143 = vector.shape_cast %142 : vector<8xf32> to vector<8x1xf32>
    %cst_54 = arith.constant 5.000000e+01 : f32
    %144 = vector.broadcast %cst_54 : f32 to vector<8x1xf32>
    %145 = arith.cmpf oge, %143, %144 : vector<8x1xf32>
    %146 = arith.select %145, %136, %132 : vector<8x1xi1>, vector<8x1xf32>
    %147 = arith.select %145, %133, %136 : vector<8x1xi1>, vector<8x1xf32>
    %c6_i32 = arith.constant 6 : i32
    %148 = arith.addf %146, %147 : vector<8x1xf32>
    %cst_55 = arith.constant 5.000000e-01 : f32
    %149 = vector.broadcast %cst_55 : f32 to vector<8x1xf32>
    %150 = arith.mulf %149, %148 : vector<8x1xf32>
    %151 = vector.broadcast %150 : vector<8x1xf32> to vector<8x128xf32>
    %152 = arith.cmpf oge, %60, %151 : vector<8x128xf32>
    %cst_56 = arith.constant 1.000000e+00 : f32
    %cst_57 = arith.constant 0.000000e+00 : f32
    %153 = vector.broadcast %cst_56 : f32 to vector<8x128xf32>
    %154 = vector.broadcast %cst_57 : f32 to vector<8x128xf32>
    %155 = arith.select %152, %153, %154 : vector<8x128xi1>, vector<8x128xf32>
    %cst_58 = arith.constant dense<0.000000e+00> : vector<8xf32>
    %156 = vector.multi_reduction <add>, %155, %cst_58 [1] : vector<8x128xf32> to vector<8xf32>
    %157 = vector.shape_cast %156 : vector<8xf32> to vector<8x1xf32>
    %cst_59 = arith.constant 5.000000e+01 : f32
    %158 = vector.broadcast %cst_59 : f32 to vector<8x1xf32>
    %159 = arith.cmpf oge, %157, %158 : vector<8x1xf32>
    %160 = arith.select %159, %150, %146 : vector<8x1xi1>, vector<8x1xf32>
    %161 = arith.select %159, %147, %150 : vector<8x1xi1>, vector<8x1xf32>
    %c7_i32 = arith.constant 7 : i32
    %162 = arith.addf %160, %161 : vector<8x1xf32>
    %cst_60 = arith.constant 5.000000e-01 : f32
    %163 = vector.broadcast %cst_60 : f32 to vector<8x1xf32>
    %164 = arith.mulf %163, %162 : vector<8x1xf32>
    %165 = vector.broadcast %164 : vector<8x1xf32> to vector<8x128xf32>
    %166 = arith.cmpf oge, %60, %165 : vector<8x128xf32>
    %cst_61 = arith.constant 1.000000e+00 : f32
    %cst_62 = arith.constant 0.000000e+00 : f32
    %167 = vector.broadcast %cst_61 : f32 to vector<8x128xf32>
    %168 = vector.broadcast %cst_62 : f32 to vector<8x128xf32>
    %169 = arith.select %166, %167, %168 : vector<8x128xi1>, vector<8x128xf32>
    %cst_63 = arith.constant dense<0.000000e+00> : vector<8xf32>
    %170 = vector.multi_reduction <add>, %169, %cst_63 [1] : vector<8x128xf32> to vector<8xf32>
    %171 = vector.shape_cast %170 : vector<8xf32> to vector<8x1xf32>
    %cst_64 = arith.constant 5.000000e+01 : f32
    %172 = vector.broadcast %cst_64 : f32 to vector<8x1xf32>
    %173 = arith.cmpf oge, %171, %172 : vector<8x1xf32>
    %174 = arith.select %173, %164, %160 : vector<8x1xi1>, vector<8x1xf32>
    %175 = arith.select %173, %161, %164 : vector<8x1xi1>, vector<8x1xf32>
    %c8_i32 = arith.constant 8 : i32
    %176 = arith.addf %174, %175 : vector<8x1xf32>
    %cst_65 = arith.constant 5.000000e-01 : f32
    %177 = vector.broadcast %cst_65 : f32 to vector<8x1xf32>
    %178 = arith.mulf %177, %176 : vector<8x1xf32>
    %179 = vector.broadcast %178 : vector<8x1xf32> to vector<8x128xf32>
    %180 = arith.cmpf oge, %60, %179 : vector<8x128xf32>
    %cst_66 = arith.constant 1.000000e+00 : f32
    %cst_67 = arith.constant 0.000000e+00 : f32
    %181 = vector.broadcast %cst_66 : f32 to vector<8x128xf32>
    %182 = vector.broadcast %cst_67 : f32 to vector<8x128xf32>
    %183 = arith.select %180, %181, %182 : vector<8x128xi1>, vector<8x128xf32>
    %cst_68 = arith.constant dense<0.000000e+00> : vector<8xf32>
    %184 = vector.multi_reduction <add>, %183, %cst_68 [1] : vector<8x128xf32> to vector<8xf32>
    %185 = vector.shape_cast %184 : vector<8xf32> to vector<8x1xf32>
    %cst_69 = arith.constant 5.000000e+01 : f32
    %186 = vector.broadcast %cst_69 : f32 to vector<8x1xf32>
    %187 = arith.cmpf oge, %185, %186 : vector<8x1xf32>
    %188 = arith.select %187, %178, %174 : vector<8x1xi1>, vector<8x1xf32>
    %189 = arith.select %187, %175, %178 : vector<8x1xi1>, vector<8x1xf32>
    %c9_i32 = arith.constant 9 : i32
    %190 = arith.addf %188, %189 : vector<8x1xf32>
    %cst_70 = arith.constant 5.000000e-01 : f32
    %191 = vector.broadcast %cst_70 : f32 to vector<8x1xf32>
    %192 = arith.mulf %191, %190 : vector<8x1xf32>
    %193 = vector.broadcast %192 : vector<8x1xf32> to vector<8x128xf32>
    %194 = arith.cmpf oge, %60, %193 : vector<8x128xf32>
    %cst_71 = arith.constant 1.000000e+00 : f32
    %cst_72 = arith.constant 0.000000e+00 : f32
    %195 = vector.broadcast %cst_71 : f32 to vector<8x128xf32>
    %196 = vector.broadcast %cst_72 : f32 to vector<8x128xf32>
    %197 = arith.select %194, %195, %196 : vector<8x128xi1>, vector<8x128xf32>
    %cst_73 = arith.constant dense<0.000000e+00> : vector<8xf32>
    %198 = vector.multi_reduction <add>, %197, %cst_73 [1] : vector<8x128xf32> to vector<8xf32>
    %199 = vector.shape_cast %198 : vector<8xf32> to vector<8x1xf32>
    %cst_74 = arith.constant 5.000000e+01 : f32
    %200 = vector.broadcast %cst_74 : f32 to vector<8x1xf32>
    %201 = arith.cmpf oge, %199, %200 : vector<8x1xf32>
    %202 = arith.select %201, %192, %188 : vector<8x1xi1>, vector<8x1xf32>
    %203 = arith.select %201, %189, %192 : vector<8x1xi1>, vector<8x1xf32>
    %c10_i32 = arith.constant 10 : i32
    %204 = arith.addf %202, %203 : vector<8x1xf32>
    %cst_75 = arith.constant 5.000000e-01 : f32
    %205 = vector.broadcast %cst_75 : f32 to vector<8x1xf32>
    %206 = arith.mulf %205, %204 : vector<8x1xf32>
    %207 = vector.broadcast %206 : vector<8x1xf32> to vector<8x128xf32>
    %208 = arith.cmpf oge, %60, %207 : vector<8x128xf32>
    %cst_76 = arith.constant 1.000000e+00 : f32
    %cst_77 = arith.constant 0.000000e+00 : f32
    %209 = vector.broadcast %cst_76 : f32 to vector<8x128xf32>
    %210 = vector.broadcast %cst_77 : f32 to vector<8x128xf32>
    %211 = arith.select %208, %209, %210 : vector<8x128xi1>, vector<8x128xf32>
    %cst_78 = arith.constant dense<0.000000e+00> : vector<8xf32>
    %212 = vector.multi_reduction <add>, %211, %cst_78 [1] : vector<8x128xf32> to vector<8xf32>
    %213 = vector.shape_cast %212 : vector<8xf32> to vector<8x1xf32>
    %cst_79 = arith.constant 5.000000e+01 : f32
    %214 = vector.broadcast %cst_79 : f32 to vector<8x1xf32>
    %215 = arith.cmpf oge, %213, %214 : vector<8x1xf32>
    %216 = arith.select %215, %206, %202 : vector<8x1xi1>, vector<8x1xf32>
    %217 = arith.select %215, %203, %206 : vector<8x1xi1>, vector<8x1xf32>
    %c11_i32 = arith.constant 11 : i32
    %218 = arith.addf %216, %217 : vector<8x1xf32>
    %cst_80 = arith.constant 5.000000e-01 : f32
    %219 = vector.broadcast %cst_80 : f32 to vector<8x1xf32>
    %220 = arith.mulf %219, %218 : vector<8x1xf32>
    %221 = vector.broadcast %220 : vector<8x1xf32> to vector<8x128xf32>
    %222 = arith.cmpf oge, %60, %221 : vector<8x128xf32>
    %cst_81 = arith.constant 1.000000e+00 : f32
    %cst_82 = arith.constant 0.000000e+00 : f32
    %223 = vector.broadcast %cst_81 : f32 to vector<8x128xf32>
    %224 = vector.broadcast %cst_82 : f32 to vector<8x128xf32>
    %225 = arith.select %222, %223, %224 : vector<8x128xi1>, vector<8x128xf32>
    %cst_83 = arith.constant dense<0.000000e+00> : vector<8xf32>
    %226 = vector.multi_reduction <add>, %225, %cst_83 [1] : vector<8x128xf32> to vector<8xf32>
    %227 = vector.shape_cast %226 : vector<8xf32> to vector<8x1xf32>
    %cst_84 = arith.constant 5.000000e+01 : f32
    %228 = vector.broadcast %cst_84 : f32 to vector<8x1xf32>
    %229 = arith.cmpf oge, %227, %228 : vector<8x1xf32>
    %230 = arith.select %229, %220, %216 : vector<8x1xi1>, vector<8x1xf32>
    %231 = arith.select %229, %217, %220 : vector<8x1xi1>, vector<8x1xf32>
    %c12_i32 = arith.constant 12 : i32
    %232 = arith.addf %230, %231 : vector<8x1xf32>
    %cst_85 = arith.constant 5.000000e-01 : f32
    %233 = vector.broadcast %cst_85 : f32 to vector<8x1xf32>
    %234 = arith.mulf %233, %232 : vector<8x1xf32>
    %235 = vector.broadcast %234 : vector<8x1xf32> to vector<8x128xf32>
    %236 = arith.cmpf oge, %60, %235 : vector<8x128xf32>
    %cst_86 = arith.constant 1.000000e+00 : f32
    %cst_87 = arith.constant 0.000000e+00 : f32
    %237 = vector.broadcast %cst_86 : f32 to vector<8x128xf32>
    %238 = vector.broadcast %cst_87 : f32 to vector<8x128xf32>
    %239 = arith.select %236, %237, %238 : vector<8x128xi1>, vector<8x128xf32>
    %cst_88 = arith.constant dense<0.000000e+00> : vector<8xf32>
    %240 = vector.multi_reduction <add>, %239, %cst_88 [1] : vector<8x128xf32> to vector<8xf32>
    %241 = vector.shape_cast %240 : vector<8xf32> to vector<8x1xf32>
    %cst_89 = arith.constant 5.000000e+01 : f32
    %242 = vector.broadcast %cst_89 : f32 to vector<8x1xf32>
    %243 = arith.cmpf oge, %241, %242 : vector<8x1xf32>
    %244 = arith.select %243, %234, %230 : vector<8x1xi1>, vector<8x1xf32>
    %245 = arith.select %243, %231, %234 : vector<8x1xi1>, vector<8x1xf32>
    %c13_i32 = arith.constant 13 : i32
    %246 = arith.addf %244, %245 : vector<8x1xf32>
    %cst_90 = arith.constant 5.000000e-01 : f32
    %247 = vector.broadcast %cst_90 : f32 to vector<8x1xf32>
    %248 = arith.mulf %247, %246 : vector<8x1xf32>
    %249 = vector.broadcast %248 : vector<8x1xf32> to vector<8x128xf32>
    %250 = arith.cmpf oge, %60, %249 : vector<8x128xf32>
    %cst_91 = arith.constant 1.000000e+00 : f32
    %cst_92 = arith.constant 0.000000e+00 : f32
    %251 = vector.broadcast %cst_91 : f32 to vector<8x128xf32>
    %252 = vector.broadcast %cst_92 : f32 to vector<8x128xf32>
    %253 = arith.select %250, %251, %252 : vector<8x128xi1>, vector<8x128xf32>
    %cst_93 = arith.constant dense<0.000000e+00> : vector<8xf32>
    %254 = vector.multi_reduction <add>, %253, %cst_93 [1] : vector<8x128xf32> to vector<8xf32>
    %255 = vector.shape_cast %254 : vector<8xf32> to vector<8x1xf32>
    %cst_94 = arith.constant 5.000000e+01 : f32
    %256 = vector.broadcast %cst_94 : f32 to vector<8x1xf32>
    %257 = arith.cmpf oge, %255, %256 : vector<8x1xf32>
    %258 = arith.select %257, %248, %244 : vector<8x1xi1>, vector<8x1xf32>
    %259 = arith.select %257, %245, %248 : vector<8x1xi1>, vector<8x1xf32>
    %c14_i32 = arith.constant 14 : i32
    %260 = arith.addf %258, %259 : vector<8x1xf32>
    %cst_95 = arith.constant 5.000000e-01 : f32
    %261 = vector.broadcast %cst_95 : f32 to vector<8x1xf32>
    %262 = arith.mulf %261, %260 : vector<8x1xf32>
    %263 = vector.broadcast %262 : vector<8x1xf32> to vector<8x128xf32>
    %264 = arith.cmpf oge, %60, %263 : vector<8x128xf32>
    %cst_96 = arith.constant 1.000000e+00 : f32
    %cst_97 = arith.constant 0.000000e+00 : f32
    %265 = vector.broadcast %cst_96 : f32 to vector<8x128xf32>
    %266 = vector.broadcast %cst_97 : f32 to vector<8x128xf32>
    %267 = arith.select %264, %265, %266 : vector<8x128xi1>, vector<8x128xf32>
    %cst_98 = arith.constant dense<0.000000e+00> : vector<8xf32>
    %268 = vector.multi_reduction <add>, %267, %cst_98 [1] : vector<8x128xf32> to vector<8xf32>
    %269 = vector.shape_cast %268 : vector<8xf32> to vector<8x1xf32>
    %cst_99 = arith.constant 5.000000e+01 : f32
    %270 = vector.broadcast %cst_99 : f32 to vector<8x1xf32>
    %271 = arith.cmpf oge, %269, %270 : vector<8x1xf32>
    %272 = arith.select %271, %262, %258 : vector<8x1xi1>, vector<8x1xf32>
    %273 = arith.select %271, %259, %262 : vector<8x1xi1>, vector<8x1xf32>
    %c15_i32 = arith.constant 15 : i32
    %274 = arith.addf %272, %273 : vector<8x1xf32>
    %cst_100 = arith.constant 5.000000e-01 : f32
    %275 = vector.broadcast %cst_100 : f32 to vector<8x1xf32>
    %276 = arith.mulf %275, %274 : vector<8x1xf32>
    %277 = vector.broadcast %276 : vector<8x1xf32> to vector<8x128xf32>
    %278 = arith.cmpf oge, %60, %277 : vector<8x128xf32>
    %cst_101 = arith.constant 1.000000e+00 : f32
    %cst_102 = arith.constant 0.000000e+00 : f32
    %279 = vector.broadcast %cst_101 : f32 to vector<8x128xf32>
    %280 = vector.broadcast %cst_102 : f32 to vector<8x128xf32>
    %281 = arith.select %278, %279, %280 : vector<8x128xi1>, vector<8x128xf32>
    %cst_103 = arith.constant dense<0.000000e+00> : vector<8xf32>
    %282 = vector.multi_reduction <add>, %281, %cst_103 [1] : vector<8x128xf32> to vector<8xf32>
    %283 = vector.shape_cast %282 : vector<8xf32> to vector<8x1xf32>
    %cst_104 = arith.constant 5.000000e+01 : f32
    %284 = vector.broadcast %cst_104 : f32 to vector<8x1xf32>
    %285 = arith.cmpf oge, %283, %284 : vector<8x1xf32>
    %286 = arith.select %285, %276, %272 : vector<8x1xi1>, vector<8x1xf32>
    %287 = arith.select %285, %273, %276 : vector<8x1xi1>, vector<8x1xf32>
    %c16_i32 = arith.constant 16 : i32
    %288 = arith.addf %286, %287 : vector<8x1xf32>
    %cst_105 = arith.constant 5.000000e-01 : f32
    %289 = vector.broadcast %cst_105 : f32 to vector<8x1xf32>
    %290 = arith.mulf %289, %288 : vector<8x1xf32>
    %291 = vector.broadcast %290 : vector<8x1xf32> to vector<8x128xf32>
    %292 = arith.cmpf oge, %60, %291 : vector<8x128xf32>
    %cst_106 = arith.constant 1.000000e+00 : f32
    %cst_107 = arith.constant 0.000000e+00 : f32
    %293 = vector.broadcast %cst_106 : f32 to vector<8x128xf32>
    %294 = vector.broadcast %cst_107 : f32 to vector<8x128xf32>
    %295 = arith.select %292, %293, %294 : vector<8x128xi1>, vector<8x128xf32>
    %cst_108 = arith.constant dense<0.000000e+00> : vector<8xf32>
    %296 = vector.multi_reduction <add>, %295, %cst_108 [1] : vector<8x128xf32> to vector<8xf32>
    %297 = vector.shape_cast %296 : vector<8xf32> to vector<8x1xf32>
    %cst_109 = arith.constant 5.000000e+01 : f32
    %298 = vector.broadcast %cst_109 : f32 to vector<8x1xf32>
    %299 = arith.cmpf oge, %297, %298 : vector<8x1xf32>
    %300 = arith.select %299, %290, %286 : vector<8x1xi1>, vector<8x1xf32>
    %301 = arith.select %299, %287, %290 : vector<8x1xi1>, vector<8x1xf32>
    %c17_i32 = arith.constant 17 : i32
    %302 = arith.addf %300, %301 : vector<8x1xf32>
    %cst_110 = arith.constant 5.000000e-01 : f32
    %303 = vector.broadcast %cst_110 : f32 to vector<8x1xf32>
    %304 = arith.mulf %303, %302 : vector<8x1xf32>
    %305 = vector.broadcast %304 : vector<8x1xf32> to vector<8x128xf32>
    %306 = arith.cmpf oge, %60, %305 : vector<8x128xf32>
    %cst_111 = arith.constant 1.000000e+00 : f32
    %cst_112 = arith.constant 0.000000e+00 : f32
    %307 = vector.broadcast %cst_111 : f32 to vector<8x128xf32>
    %308 = vector.broadcast %cst_112 : f32 to vector<8x128xf32>
    %309 = arith.select %306, %307, %308 : vector<8x128xi1>, vector<8x128xf32>
    %cst_113 = arith.constant dense<0.000000e+00> : vector<8xf32>
    %310 = vector.multi_reduction <add>, %309, %cst_113 [1] : vector<8x128xf32> to vector<8xf32>
    %311 = vector.shape_cast %310 : vector<8xf32> to vector<8x1xf32>
    %cst_114 = arith.constant 5.000000e+01 : f32
    %312 = vector.broadcast %cst_114 : f32 to vector<8x1xf32>
    %313 = arith.cmpf oge, %311, %312 : vector<8x1xf32>
    %314 = arith.select %313, %304, %300 : vector<8x1xi1>, vector<8x1xf32>
    %315 = arith.select %313, %301, %304 : vector<8x1xi1>, vector<8x1xf32>
    %c18_i32 = arith.constant 18 : i32
    %316 = arith.addf %314, %315 : vector<8x1xf32>
    %cst_115 = arith.constant 5.000000e-01 : f32
    %317 = vector.broadcast %cst_115 : f32 to vector<8x1xf32>
    %318 = arith.mulf %317, %316 : vector<8x1xf32>
    %319 = vector.broadcast %318 : vector<8x1xf32> to vector<8x128xf32>
    %320 = arith.cmpf oge, %60, %319 : vector<8x128xf32>
    %cst_116 = arith.constant 1.000000e+00 : f32
    %cst_117 = arith.constant 0.000000e+00 : f32
    %321 = vector.broadcast %cst_116 : f32 to vector<8x128xf32>
    %322 = vector.broadcast %cst_117 : f32 to vector<8x128xf32>
    %323 = arith.select %320, %321, %322 : vector<8x128xi1>, vector<8x128xf32>
    %cst_118 = arith.constant dense<0.000000e+00> : vector<8xf32>
    %324 = vector.multi_reduction <add>, %323, %cst_118 [1] : vector<8x128xf32> to vector<8xf32>
    %325 = vector.shape_cast %324 : vector<8xf32> to vector<8x1xf32>
    %cst_119 = arith.constant 5.000000e+01 : f32
    %326 = vector.broadcast %cst_119 : f32 to vector<8x1xf32>
    %327 = arith.cmpf oge, %325, %326 : vector<8x1xf32>
    %328 = arith.select %327, %318, %314 : vector<8x1xi1>, vector<8x1xf32>
    %329 = arith.select %327, %315, %318 : vector<8x1xi1>, vector<8x1xf32>
    %c19_i32 = arith.constant 19 : i32
    %330 = arith.addf %328, %329 : vector<8x1xf32>
    %cst_120 = arith.constant 5.000000e-01 : f32
    %331 = vector.broadcast %cst_120 : f32 to vector<8x1xf32>
    %332 = arith.mulf %331, %330 : vector<8x1xf32>
    %333 = vector.broadcast %332 : vector<8x1xf32> to vector<8x128xf32>
    %334 = arith.cmpf oge, %60, %333 : vector<8x128xf32>
    %cst_121 = arith.constant 1.000000e+00 : f32
    %cst_122 = arith.constant 0.000000e+00 : f32
    %335 = vector.broadcast %cst_121 : f32 to vector<8x128xf32>
    %336 = vector.broadcast %cst_122 : f32 to vector<8x128xf32>
    %337 = arith.select %334, %335, %336 : vector<8x128xi1>, vector<8x128xf32>
    %cst_123 = arith.constant dense<0.000000e+00> : vector<8xf32>
    %338 = vector.multi_reduction <add>, %337, %cst_123 [1] : vector<8x128xf32> to vector<8xf32>
    %339 = vector.shape_cast %338 : vector<8xf32> to vector<8x1xf32>
    %cst_124 = arith.constant 5.000000e+01 : f32
    %340 = vector.broadcast %cst_124 : f32 to vector<8x1xf32>
    %341 = arith.cmpf oge, %339, %340 : vector<8x1xf32>
    %342 = arith.select %341, %332, %328 : vector<8x1xi1>, vector<8x1xf32>
    %343 = arith.select %341, %329, %332 : vector<8x1xi1>, vector<8x1xf32>
    %c20_i32 = arith.constant 20 : i32
    %344 = arith.addf %342, %343 : vector<8x1xf32>
    %cst_125 = arith.constant 5.000000e-01 : f32
    %345 = vector.broadcast %cst_125 : f32 to vector<8x1xf32>
    %346 = arith.mulf %345, %344 : vector<8x1xf32>
    %347 = vector.broadcast %346 : vector<8x1xf32> to vector<8x128xf32>
    %348 = arith.cmpf oge, %60, %347 : vector<8x128xf32>
    %cst_126 = arith.constant 1.000000e+00 : f32
    %cst_127 = arith.constant 0.000000e+00 : f32
    %349 = vector.broadcast %cst_126 : f32 to vector<8x128xf32>
    %350 = vector.broadcast %cst_127 : f32 to vector<8x128xf32>
    %351 = arith.select %348, %349, %350 : vector<8x128xi1>, vector<8x128xf32>
    %cst_128 = arith.constant dense<0.000000e+00> : vector<8xf32>
    %352 = vector.multi_reduction <add>, %351, %cst_128 [1] : vector<8x128xf32> to vector<8xf32>
    %353 = vector.shape_cast %352 : vector<8xf32> to vector<8x1xf32>
    %cst_129 = arith.constant 5.000000e+01 : f32
    %354 = vector.broadcast %cst_129 : f32 to vector<8x1xf32>
    %355 = arith.cmpf oge, %353, %354 : vector<8x1xf32>
    %356 = arith.select %355, %346, %342 : vector<8x1xi1>, vector<8x1xf32>
    %357 = arith.select %355, %343, %346 : vector<8x1xi1>, vector<8x1xf32>
    %c21_i32 = arith.constant 21 : i32
    %358 = arith.addf %356, %357 : vector<8x1xf32>
    %cst_130 = arith.constant 5.000000e-01 : f32
    %359 = vector.broadcast %cst_130 : f32 to vector<8x1xf32>
    %360 = arith.mulf %359, %358 : vector<8x1xf32>
    %361 = vector.broadcast %360 : vector<8x1xf32> to vector<8x128xf32>
    %362 = arith.cmpf oge, %60, %361 : vector<8x128xf32>
    %cst_131 = arith.constant 1.000000e+00 : f32
    %cst_132 = arith.constant 0.000000e+00 : f32
    %363 = vector.broadcast %cst_131 : f32 to vector<8x128xf32>
    %364 = vector.broadcast %cst_132 : f32 to vector<8x128xf32>
    %365 = arith.select %362, %363, %364 : vector<8x128xi1>, vector<8x128xf32>
    %cst_133 = arith.constant dense<0.000000e+00> : vector<8xf32>
    %366 = vector.multi_reduction <add>, %365, %cst_133 [1] : vector<8x128xf32> to vector<8xf32>
    %367 = vector.shape_cast %366 : vector<8xf32> to vector<8x1xf32>
    %cst_134 = arith.constant 5.000000e+01 : f32
    %368 = vector.broadcast %cst_134 : f32 to vector<8x1xf32>
    %369 = arith.cmpf oge, %367, %368 : vector<8x1xf32>
    %370 = arith.select %369, %360, %356 : vector<8x1xi1>, vector<8x1xf32>
    %371 = arith.select %369, %357, %360 : vector<8x1xi1>, vector<8x1xf32>
    %372 = vector.broadcast %370 : vector<8x1xf32> to vector<8x128xf32>
    %373 = arith.cmpf ogt, %60, %372 : vector<8x128xf32>
    %cst_135 = arith.constant 1.000000e+00 : f32
    %cst_136 = arith.constant 0.000000e+00 : f32
    %374 = vector.broadcast %cst_135 : f32 to vector<8x128xf32>
    %375 = vector.broadcast %cst_136 : f32 to vector<8x128xf32>
    %376 = arith.select %373, %374, %375 : vector<8x128xi1>, vector<8x128xf32>
    %cst_137 = arith.constant dense<0.000000e+00> : vector<8xf32>
    %377 = vector.multi_reduction <add>, %376, %cst_137 [1] : vector<8x128xf32> to vector<8xf32>
    %378 = vector.shape_cast %377 : vector<8xf32> to vector<8x1xf32>
    %379 = vector.broadcast %370 : vector<8x1xf32> to vector<8x128xf32>
    %380 = arith.cmpf oge, %60, %379 : vector<8x128xf32>
    %cst_138 = arith.constant 1.000000e+00 : f32
    %cst_139 = arith.constant 0.000000e+00 : f32
    %381 = vector.broadcast %cst_138 : f32 to vector<8x128xf32>
    %382 = vector.broadcast %cst_139 : f32 to vector<8x128xf32>
    %383 = arith.select %380, %381, %382 : vector<8x128xi1>, vector<8x128xf32>
    %cst_140 = arith.constant dense<0.000000e+00> : vector<8xf32>
    %384 = vector.multi_reduction <add>, %383, %cst_140 [1] : vector<8x128xf32> to vector<8xf32>
    %385 = vector.shape_cast %384 : vector<8xf32> to vector<8x1xf32>
    %386 = arith.subf %385, %378 : vector<8x1xf32>
    %cst_141 = arith.constant 0.000000e+00 : f32
    %387 = vector.broadcast %cst_141 : f32 to vector<8x128xf32>
    %388 = arith.select %373, %27, %387 : vector<8x128xi1>, vector<8x128xf32>
    %cst_142 = arith.constant dense<0.000000e+00> : vector<8xf32>
    %389 = vector.multi_reduction <add>, %388, %cst_142 [1] : vector<8x128xf32> to vector<8xf32>
    %390 = vector.shape_cast %389 : vector<8xf32> to vector<8x1xf32>
    %cst_143 = arith.constant 5.000000e+01 : f32
    %391 = vector.broadcast %cst_143 : f32 to vector<8x1xf32>
    %392 = arith.subf %391, %378 : vector<8x1xf32>
    %cst_144 = arith.constant 0.000000e+00 : f32
    %393 = vector.broadcast %cst_144 : f32 to vector<8x1xf32>
    %394 = arith.maximumf %393, %392 : vector<8x1xf32>
    %395 = arith.minimumf %386, %394 : vector<8x1xf32>
    %396 = arith.subf %370, %24 : vector<8x1xf32>
    %397 = math.exp %396 : vector<8x1xf32>
    %398 = arith.mulf %395, %397 : vector<8x1xf32>
    %399 = arith.addf %390, %398 : vector<8x1xf32>
    %400 = arith.addf %43, %399 : vector<8x1xf32>
    %401 = math.log %400 : vector<8x1xf32>
    %402 = arith.addf %24, %401 : vector<8x1xf32>
    %403 = arith.subf %402, %55 : vector<8x1xf32>
    %404 = arith.mulf %11, %403 : vector<8x1xf32>
    %405 = arith.addf %35, %404 : vector<8x1xf32>
    %c0_145 = arith.constant 0 : index
    %c0_146 = arith.constant 0 : index
    %406 = vector.load %arg6[%c0_145, %c0_146] : memref<8x1xf32, #tpu.memory_space<vmem>>, vector<8x1xf32>
    tpu.vector_store %arg6[%c0_145, %c0_146], %405 {strides = array<i32>} : memref<8x1xf32, #tpu.memory_space<vmem>>, vector<8x1xf32>,
    return
  }
  func.func @transform_0(%arg0: i32) -> (i32, i32) {
    %c0_i32 = arith.constant 0 : i32
    %c0_i32_0 = arith.constant 0 : i32
    return %arg0, %c0_i32 : i32, i32
  }
  func.func @transform_1(%arg0: i32) -> (i32, i32) {
    %c0_i32 = arith.constant 0 : i32
    %c0_i32_0 = arith.constant 0 : i32
    %c0_i32_1 = arith.constant 0 : i32
    return %c0_i32, %c0_i32_0 : i32, i32
  }
  func.func @transform_2(%arg0: i32) -> (i32, i32) {
    %c0_i32 = arith.constant 0 : i32
    %c0_i32_0 = arith.constant 0 : i32
    %c0_i32_1 = arith.constant 0 : i32
    return %c0_i32, %c0_i32_0 : i32, i32
  }
  func.func @transform_3(%arg0: i32) -> (i32, i32) {
    %c0_i32 = arith.constant 0 : i32
    %c0_i32_0 = arith.constant 0 : i32
    return %arg0, %c0_i32 : i32, i32
  }
  func.func @transform_4(%arg0: i32) -> (i32, i32) {
    %c0_i32 = arith.constant 0 : i32
    %c0_i32_0 = arith.constant 0 : i32
    return %arg0, %c0_i32 : i32, i32
  }
  func.func @transform_5(%arg0: i32) -> (i32, i32) {
    %c0_i32 = arith.constant 0 : i32
    %c0_i32_0 = arith.constant 0 : i32
    return %arg0, %c0_i32 : i32, i32
  }
}

module attributes {stable_mosaic.version = 11 : i64} {
  func.func @_cap_loss_kernel(%arg0: i32, %arg1: memref<8x128xbf16, #tpu.memory_space<vmem>>, %arg2: memref<128x128xbf16, #tpu.memory_space<vmem>>, %arg3: memref<1x128xi32, #tpu.memory_space<vmem>>, %arg4: memref<8x4xi32, #tpu.memory_space<vmem>>, %arg5: memref<8x2xf32, #tpu.memory_space<vmem>>, %arg6: memref<8x1xf32, #tpu.memory_space<vmem>>) attributes {dimension_semantics = [#tpu.dimension_semantics<parallel>], iteration_bounds = array<i64: 2>, scalar_prefetch = 0 : i64, scratch_operands = 0 : i64, tpu.core_type = #tpu.core_type<tc>, window_params = [{transform_indices = @transform_0, window_bounds = array<i64: 8, 128>}, {pipeline_mode = #tpu.pipeline_mode<synchronous>, transform_indices = @transform_1, window_bounds = array<i64: 128, 128>}, {pipeline_mode = #tpu.pipeline_mode<synchronous>, transform_indices = @transform_2, window_bounds = array<i64: 1, 128>}, {transform_indices = @transform_3, window_bounds = array<i64: 8, 4>}, {transform_indices = @transform_4, window_bounds = array<i64: 8, 2>}, {transform_indices = @transform_5, window_bounds = array<i64: 8, 1>}]} {
    %c0 = arith.constant 0 : index
    %c0_0 = arith.constant 0 : index
    %0 = vector.load %arg1[%c0, %c0_0] : memref<8x128xbf16, #tpu.memory_space<vmem>>, vector<8x128xbf16>
    %c0_1 = arith.constant 0 : index
    %c0_2 = arith.constant 0 : index
    %1 = vector.load %arg2[%c0_1, %c0_2] : memref<128x128xbf16, #tpu.memory_space<vmem>>, vector<128x128xbf16>
    %cst = arith.constant dense<0.000000e+00> : vector<8x128xf32>
    %2 = tpu.matmul %0, %1, %cst {dimension_numbers = #tpu.dot_dimension_numbers<[1], [0], [0], [1], [0, 0, 1, 1], [], []>} : vector<8x128xbf16>, vector<128x128xbf16>, vector<8x128xf32> -> vector<8x128xf32>
    %3 = tpu.iota {dimensions = array<i32: 1>} : vector<8x128xi32>
    %c0_3 = arith.constant 0 : index
    %c0_4 = arith.constant 0 : index
    %4 = vector.load %arg4[%c0_3, %c0_4] : memref<8x4xi32, #tpu.memory_space<vmem>>, vector<8x4xi32>
    %5 = vector.extract_strided_slice %4 {offsets = [0, 0], sizes = [8, 1], strides = [1, 1]} : vector<8x4xi32> to vector<8x1xi32>
    %6 = vector.extract_strided_slice %4 {offsets = [0, 1], sizes = [8, 1], strides = [1, 1]} : vector<8x4xi32> to vector<8x1xi32>
    %7 = vector.extract_strided_slice %4 {offsets = [0, 2], sizes = [8, 1], strides = [1, 1]} : vector<8x4xi32> to vector<8x1xi32>
    %8 = vector.extract_strided_slice %4 {offsets = [0, 3], sizes = [8, 1], strides = [1, 1]} : vector<8x4xi32> to vector<8x1xi32>
    %c0_5 = arith.constant 0 : index
    %c0_6 = arith.constant 0 : index
    %9 = vector.load %arg5[%c0_5, %c0_6] : memref<8x2xf32, #tpu.memory_space<vmem>>, vector<8x2xf32>
    %10 = vector.extract_strided_slice %9 {offsets = [0, 0], sizes = [8, 1], strides = [1, 1]} : vector<8x2xf32> to vector<8x1xf32>
    %11 = vector.extract_strided_slice %9 {offsets = [0, 1], sizes = [8, 1], strides = [1, 1]} : vector<8x2xf32> to vector<8x1xf32>
    %12 = vector.broadcast %6 : vector<8x1xi32> to vector<8x128xi32>
    %13 = arith.cmpi sge, %3, %12 : vector<8x128xi32>
    %14 = vector.broadcast %7 : vector<8x1xi32> to vector<8x128xi32>
    %15 = arith.cmpi slt, %3, %14 : vector<8x128xi32>
    %16 = arith.andi %13, %15 : vector<8x128xi1>
    %17 = vector.broadcast %5 : vector<8x1xi32> to vector<8x128xi32>
    %18 = arith.cmpi eq, %3, %17 : vector<8x128xi32>
    %cst_7 = arith.constant 0.000000e+00 : f32
    %19 = vector.broadcast %cst_7 : f32 to vector<8x128xf32>
    %20 = arith.select %18, %2, %19 : vector<8x128xi1>, vector<8x128xf32>
    %cst_8 = arith.constant dense<0.000000e+00> : vector<8xf32>
    %21 = vector.multi_reduction <add>, %20, %cst_8 [1] : vector<8x128xf32> to vector<8xf32>
    %22 = vector.shape_cast %21 : vector<8xf32> to vector<8x1xf32>
    %cst_9 = arith.constant dense<0xFF800000> : vector<8xf32>
    %23 = vector.multi_reduction <maximumf>, %2, %cst_9 [1] : vector<8x128xf32> to vector<8xf32>
    %24 = vector.shape_cast %23 : vector<8xf32> to vector<8x1xf32>
    %25 = vector.broadcast %24 : vector<8x1xf32> to vector<8x128xf32>
    %26 = arith.subf %2, %25 : vector<8x128xf32>
    %27 = math.exp %26 : vector<8x128xf32>
    %cst_10 = arith.constant 0.000000e+00 : f32
    %28 = vector.broadcast %cst_10 : f32 to vector<8x128xf32>
    %29 = arith.select %16, %27, %28 : vector<8x128xi1>, vector<8x128xf32>
    %cst_11 = arith.constant dense<0.000000e+00> : vector<8xf32>
    %30 = vector.multi_reduction <add>, %29, %cst_11 [1] : vector<8x128xf32> to vector<8xf32>
    %31 = vector.shape_cast %30 : vector<8xf32> to vector<8x1xf32>
    %32 = math.log %31 : vector<8x1xf32>
    %33 = arith.addf %24, %32 : vector<8x1xf32>
    %34 = arith.subf %33, %22 : vector<8x1xf32>
    %35 = arith.mulf %10, %34 : vector<8x1xf32>
    %c0_12 = arith.constant 0 : index
    %c0_13 = arith.constant 0 : index
    %36 = vector.load %arg3[%c0_12, %c0_13] : memref<1x128xi32, #tpu.memory_space<vmem>>, vector<1x128xi32>
    %37 = vector.broadcast %36 : vector<1x128xi32> to vector<8x128xi32>
    %38 = vector.broadcast %8 : vector<8x1xi32> to vector<8x128xi32>
    %39 = arith.cmpi eq, %37, %38 : vector<8x128xi32>
    %cst_14 = arith.constant 0.000000e+00 : f32
    %40 = vector.broadcast %cst_14 : f32 to vector<8x128xf32>
    %41 = arith.select %39, %27, %40 : vector<8x128xi1>, vector<8x128xf32>
    %cst_15 = arith.constant dense<0.000000e+00> : vector<8xf32>
    %42 = vector.multi_reduction <add>, %41, %cst_15 [1] : vector<8x128xf32> to vector<8xf32>
    %43 = vector.shape_cast %42 : vector<8xf32> to vector<8x1xf32>
    %cst_16 = arith.constant 1.000000e+00 : f32
    %cst_17 = arith.constant 0.000000e+00 : f32
    %44 = vector.broadcast %cst_16 : f32 to vector<8x128xf32>
    %45 = vector.broadcast %cst_17 : f32 to vector<8x128xf32>
    %46 = arith.select %39, %44, %45 : vector<8x128xi1>, vector<8x128xf32>
    %cst_18 = arith.constant dense<0.000000e+00> : vector<8xf32>
    %47 = vector.multi_reduction <add>, %46, %cst_18 [1] : vector<8x128xf32> to vector<8xf32>
    %48 = vector.shape_cast %47 : vector<8xf32> to vector<8x1xf32>
    %cst_19 = arith.constant 0.000000e+00 : f32
    %49 = vector.broadcast %cst_19 : f32 to vector<8x128xf32>
    %50 = arith.select %39, %2, %49 : vector<8x128xi1>, vector<8x128xf32>
    %cst_20 = arith.constant dense<0.000000e+00> : vector<8xf32>
    %51 = vector.multi_reduction <add>, %50, %cst_20 [1] : vector<8x128xf32> to vector<8xf32>
    %52 = vector.shape_cast %51 : vector<8xf32> to vector<8x1xf32>
    %cst_21 = arith.constant 1.000000e+00 : f32
    %53 = vector.broadcast %cst_21 : f32 to vector<8x1xf32>
    %54 = arith.maximumf %48, %53 : vector<8x1xf32>
    %55 = arith.divf %52, %54 : vector<8x1xf32>
    %c80_i32 = arith.constant 80 : i32
    %56 = vector.broadcast %c80_i32 : i32 to vector<8x128xi32>
    %57 = arith.cmpi sge, %3, %56 : vector<8x128xi32>
    %58 = arith.ori %39, %57 : vector<8x128xi1>
    %cst_22 = arith.constant -1.000000e+30 : f32
    %59 = vector.broadcast %cst_22 : f32 to vector<8x128xf32>
    %60 = arith.select %58, %59, %2 : vector<8x128xi1>, vector<8x128xf32>
    %cst_23 = arith.constant -2.100000e+01 : f32
    %61 = vector.broadcast %cst_23 : f32 to vector<8x1xf32>
    %cst_24 = arith.constant 1.000000e+00 : f32
    %62 = vector.broadcast %cst_24 : f32 to vector<8x1xf32>
    %63 = arith.addf %24, %62 : vector<8x1xf32>
    %c0_i32 = arith.constant 0 : i32
    %64 = arith.addf %61, %63 : vector<8x1xf32>
    %cst_25 = arith.constant 5.000000e-01 : f32
    %65 = vector.broadcast %cst_25 : f32 to vector<8x1xf32>
    %66 = arith.mulf %65, %64 : vector<8x1xf32>
    %67 = vector.broadcast %66 : vector<8x1xf32> to vector<8x128xf32>
    %68 = arith.cmpf oge, %60, %67 : vector<8x128xf32>
    %cst_26 = arith.constant 1.000000e+00 : f32
    %cst_27 = arith.constant 0.000000e+00 : f32
    %69 = vector.broadcast %cst_26 : f32 to vector<8x128xf32>
    %70 = vector.broadcast %cst_27 : f32 to vector<8x128xf32>
    %71 = arith.select %68, %69, %70 : vector<8x128xi1>, vector<8x128xf32>
    %cst_28 = arith.constant dense<0.000000e+00> : vector<8xf32>
    %72 = vector.multi_reduction <add>, %71, %cst_28 [1] : vector<8x128xf32> to vector<8xf32>
    %73 = vector.shape_cast %72 : vector<8xf32> to vector<8x1xf32>
    %cst_29 = arith.constant 5.000000e+01 : f32
    %74 = vector.broadcast %cst_29 : f32 to vector<8x1xf32>
    %75 = arith.cmpf oge, %73, %74 : vector<8x1xf32>
    %76 = arith.select %75, %66, %61 : vector<8x1xi1>, vector<8x1xf32>
    %77 = arith.select %75, %63, %66 : vector<8x1xi1>, vector<8x1xf32>
    %c1_i32 = arith.constant 1 : i32
    %78 = arith.addf %76, %77 : vector<8x1xf32>
    %cst_30 = arith.constant 5.000000e-01 : f32
    %79 = vector.broadcast %cst_30 : f32 to vector<8x1xf32>
    %80 = arith.mulf %79, %78 : vector<8x1xf32>
    %81 = vector.broadcast %80 : vector<8x1xf32> to vector<8x128xf32>
    %82 = arith.cmpf oge, %60, %81 : vector<8x128xf32>
    %cst_31 = arith.constant 1.000000e+00 : f32
    %cst_32 = arith.constant 0.000000e+00 : f32
    %83 = vector.broadcast %cst_31 : f32 to vector<8x128xf32>
    %84 = vector.broadcast %cst_32 : f32 to vector<8x128xf32>
    %85 = arith.select %82, %83, %84 : vector<8x128xi1>, vector<8x128xf32>
    %cst_33 = arith.constant dense<0.000000e+00> : vector<8xf32>
    %86 = vector.multi_reduction <add>, %85, %cst_33 [1] : vector<8x128xf32> to vector<8xf32>
    %87 = vector.shape_cast %86 : vector<8xf32> to vector<8x1xf32>
    %cst_34 = arith.constant 5.000000e+01 : f32
    %88 = vector.broadcast %cst_34 : f32 to vector<8x1xf32>
    %89 = arith.cmpf oge, %87, %88 : vector<8x1xf32>
    %90 = arith.select %89, %80, %76 : vector<8x1xi1>, vector<8x1xf32>
    %91 = arith.select %89, %77, %80 : vector<8x1xi1>, vector<8x1xf32>
    %c2_i32 = arith.constant 2 : i32
    %92 = arith.addf %90, %91 : vector<8x1xf32>
    %cst_35 = arith.constant 5.000000e-01 : f32
    %93 = vector.broadcast %cst_35 : f32 to vector<8x1xf32>
    %94 = arith.mulf %93, %92 : vector<8x1xf32>
    %95 = vector.broadcast %94 : vector<8x1xf32> to vector<8x128xf32>
    %96 = arith.cmpf oge, %60, %95 : vector<8x128xf32>
    %cst_36 = arith.constant 1.000000e+00 : f32
    %cst_37 = arith.constant 0.000000e+00 : f32
    %97 = vector.broadcast %cst_36 : f32 to vector<8x128xf32>
    %98 = vector.broadcast %cst_37 : f32 to vector<8x128xf32>
    %99 = arith.select %96, %97, %98 : vector<8x128xi1>, vector<8x128xf32>
    %cst_38 = arith.constant dense<0.000000e+00> : vector<8xf32>
    %100 = vector.multi_reduction <add>, %99, %cst_38 [1] : vector<8x128xf32> to vector<8xf32>
    %101 = vector.shape_cast %100 : vector<8xf32> to vector<8x1xf32>
    %cst_39 = arith.constant 5.000000e+01 : f32
    %102 = vector.broadcast %cst_39 : f32 to vector<8x1xf32>
    %103 = arith.cmpf oge, %101, %102 : vector<8x1xf32>
    %104 = arith.select %103, %94, %90 : vector<8x1xi1>, vector<8x1xf32>
    %105 = arith.select %103, %91, %94 : vector<8x1xi1>, vector<8x1xf32>
    %c3_i32 = arith.constant 3 : i32
    %106 = arith.addf %104, %105 : vector<8x1xf32>
    %cst_40 = arith.constant 5.000000e-01 : f32
    %107 = vector.broadcast %cst_40 : f32 to vector<8x1xf32>
    %108 = arith.mulf %107, %106 : vector<8x1xf32>
    %109 = vector.broadcast %108 : vector<8x1xf32> to vector<8x128xf32>
    %110 = arith.cmpf oge, %60, %109 : vector<8x128xf32>
    %cst_41 = arith.constant 1.000000e+00 : f32
    %cst_42 = arith.constant 0.000000e+00 : f32
    %111 = vector.broadcast %cst_41 : f32 to vector<8x128xf32>
    %112 = vector.broadcast %cst_42 : f32 to vector<8x128xf32>
    %113 = arith.select %110, %111, %112 : vector<8x128xi1>, vector<8x128xf32>
    %cst_43 = arith.constant dense<0.000000e+00> : vector<8xf32>
    %114 = vector.multi_reduction <add>, %113, %cst_43 [1] : vector<8x128xf32> to vector<8xf32>
    %115 = vector.shape_cast %114 : vector<8xf32> to vector<8x1xf32>
    %cst_44 = arith.constant 5.000000e+01 : f32
    %116 = vector.broadcast %cst_44 : f32 to vector<8x1xf32>
    %117 = arith.cmpf oge, %115, %116 : vector<8x1xf32>
    %118 = arith.select %117, %108, %104 : vector<8x1xi1>, vector<8x1xf32>
    %119 = arith.select %117, %105, %108 : vector<8x1xi1>, vector<8x1xf32>
    %c4_i32 = arith.constant 4 : i32
    %120 = arith.addf %118, %119 : vector<8x1xf32>
    %cst_45 = arith.constant 5.000000e-01 : f32
    %121 = vector.broadcast %cst_45 : f32 to vector<8x1xf32>
    %122 = arith.mulf %121, %120 : vector<8x1xf32>
    %123 = vector.broadcast %122 : vector<8x1xf32> to vector<8x128xf32>
    %124 = arith.cmpf oge, %60, %123 : vector<8x128xf32>
    %cst_46 = arith.constant 1.000000e+00 : f32
    %cst_47 = arith.constant 0.000000e+00 : f32
    %125 = vector.broadcast %cst_46 : f32 to vector<8x128xf32>
    %126 = vector.broadcast %cst_47 : f32 to vector<8x128xf32>
    %127 = arith.select %124, %125, %126 : vector<8x128xi1>, vector<8x128xf32>
    %cst_48 = arith.constant dense<0.000000e+00> : vector<8xf32>
    %128 = vector.multi_reduction <add>, %127, %cst_48 [1] : vector<8x128xf32> to vector<8xf32>
    %129 = vector.shape_cast %128 : vector<8xf32> to vector<8x1xf32>
    %cst_49 = arith.constant 5.000000e+01 : f32
    %130 = vector.broadcast %cst_49 : f32 to vector<8x1xf32>
    %131 = arith.cmpf oge, %129, %130 : vector<8x1xf32>
    %132 = arith.select %131, %122, %118 : vector<8x1xi1>, vector<8x1xf32>
    %133 = arith.select %131, %119, %122 : vector<8x1xi1>, vector<8x1xf32>
    %c5_i32 = arith.constant 5 : i32
    %134 = arith.addf %132, %133 : vector<8x1xf32>
    %cst_50 = arith.constant 5.000000e-01 : f32
    %135 = vector.broadcast %cst_50 : f32 to vector<8x1xf32>
    %136 = arith.mulf %135, %134 : vector<8x1xf32>
    %137 = vector.broadcast %136 : vector<8x1xf32> to vector<8x128xf32>
    %138 = arith.cmpf oge, %60, %137 : vector<8x128xf32>
    %cst_51 = arith.constant 1.000000e+00 : f32
    %cst_52 = arith.constant 0.000000e+00 : f32
    %139 = vector.broadcast %cst_51 : f32 to vector<8x128xf32>
    %140 = vector.broadcast %cst_52 : f32 to vector<8x128xf32>
    %141 = arith.select %138, %139, %140 : vector<8x128xi1>, vector<8x128xf32>
    %cst_53 = arith.constant dense<0.000000e+00> : vector<8xf32>
    %142 = vector.multi_reduction <add>, %141, %cst_53 [1] : vector<8x128xf32> to vector<8xf32>
    %143 = vector.shape_cast %142 : vector<8xf32> to vector<8x1xf32>
    %cst_54 = arith.constant 5.000000e+01 : f32
    %144 = vector.broadcast %cst_54 : f32 to vector<8x1xf32>
    %145 = arith.cmpf oge, %143, %144 : vector<8x1xf32>
    %146 = arith.select %145, %136, %132 : vector<8x1xi1>, vector<8x1xf32>
    %147 = arith.select %145, %133, %136 : vector<8x1xi1>, vector<8x1xf32>
    %c6_i32 = arith.constant 6 : i32
    %148 = arith.addf %146, %147 : vector<8x1xf32>
    %cst_55 = arith.constant 5.000000e-01 : f32
    %149 = vector.broadcast %cst_55 : f32 to vector<8x1xf32>
    %150 = arith.mulf %149, %148 : vector<8x1xf32>
    %151 = vector.broadcast %150 : vector<8x1xf32> to vector<8x128xf32>
    %152 = arith.cmpf oge, %60, %151 : vector<8x128xf32>
    %cst_56 = arith.constant 1.000000e+00 : f32
    %cst_57 = arith.constant 0.000000e+00 : f32
    %153 = vector.broadcast %cst_56 : f32 to vector<8x128xf32>
    %154 = vector.broadcast %cst_57 : f32 to vector<8x128xf32>
    %155 = arith.select %152, %153, %154 : vector<8x128xi1>, vector<8x128xf32>
    %cst_58 = arith.constant dense<0.000000e+00> : vector<8xf32>
    %156 = vector.multi_reduction <add>, %155, %cst_58 [1] : vector<8x128xf32> to vector<8xf32>
    %157 = vector.shape_cast %156 : vector<8xf32> to vector<8x1xf32>
    %cst_59 = arith.constant 5.000000e+01 : f32
    %158 = vector.broadcast %cst_59 : f32 to vector<8x1xf32>
    %159 = arith.cmpf oge, %157, %158 : vector<8x1xf32>
    %160 = arith.select %159, %150, %146 : vector<8x1xi1>, vector<8x1xf32>
    %161 = arith.select %159, %147, %150 : vector<8x1xi1>, vector<8x1xf32>
    %c7_i32 = arith.constant 7 : i32
    %162 = arith.addf %160, %161 : vector<8x1xf32>
    %cst_60 = arith.constant 5.000000e-01 : f32
    %163 = vector.broadcast %cst_60 : f32 to vector<8x1xf32>
    %164 = arith.mulf %163, %162 : vector<8x1xf32>
    %165 = vector.broadcast %164 : vector<8x1xf32> to vector<8x128xf32>
    %166 = arith.cmpf oge, %60, %165 : vector<8x128xf32>
    %cst_61 = arith.constant 1.000000e+00 : f32
    %cst_62 = arith.constant 0.000000e+00 : f32
    %167 = vector.broadcast %cst_61 : f32 to vector<8x128xf32>
    %168 = vector.broadcast %cst_62 : f32 to vector<8x128xf32>
    %169 = arith.select %166, %167, %168 : vector<8x128xi1>, vector<8x128xf32>
    %cst_63 = arith.constant dense<0.000000e+00> : vector<8xf32>
    %170 = vector.multi_reduction <add>, %169, %cst_63 [1] : vector<8x128xf32> to vector<8xf32>
    %171 = vector.shape_cast %170 : vector<8xf32> to vector<8x1xf32>
    %cst_64 = arith.constant 5.000000e+01 : f32
    %172 = vector.broadcast %cst_64 : f32 to vector<8x1xf32>
    %173 = arith.cmpf oge, %171, %172 : vector<8x1xf32>
    %174 = arith.select %173, %164, %160 : vector<8x1xi1>, vector<8x1xf32>
    %175 = arith.select %173, %161, %164 : vector<8x1xi1>, vector<8x1xf32>
    %c8_i32 = arith.constant 8 : i32
    %176 = arith.addf %174, %175 : vector<8x1xf32>
    %cst_65 = arith.constant 5.000000e-01 : f32
    %177 = vector.broadcast %cst_65 : f32 to vector<8x1xf32>
    %178 = arith.mulf %177, %176 : vector<8x1xf32>
    %179 = vector.broadcast %178 : vector<8x1xf32> to vector<8x128xf32>
    %180 = arith.cmpf oge, %60, %179 : vector<8x128xf32>
    %cst_66 = arith.constant 1.000000e+00 : f32
    %cst_67 = arith.constant 0.000000e+00 : f32
    %181 = vector.broadcast %cst_66 : f32 to vector<8x128xf32>
    %182 = vector.broadcast %cst_67 : f32 to vector<8x128xf32>
    %183 = arith.select %180, %181, %182 : vector<8x128xi1>, vector<8x128xf32>
    %cst_68 = arith.constant dense<0.000000e+00> : vector<8xf32>
    %184 = vector.multi_reduction <add>, %183, %cst_68 [1] : vector<8x128xf32> to vector<8xf32>
    %185 = vector.shape_cast %184 : vector<8xf32> to vector<8x1xf32>
    %cst_69 = arith.constant 5.000000e+01 : f32
    %186 = vector.broadcast %cst_69 : f32 to vector<8x1xf32>
    %187 = arith.cmpf oge, %185, %186 : vector<8x1xf32>
    %188 = arith.select %187, %178, %174 : vector<8x1xi1>, vector<8x1xf32>
    %189 = arith.select %187, %175, %178 : vector<8x1xi1>, vector<8x1xf32>
    %c9_i32 = arith.constant 9 : i32
    %190 = arith.addf %188, %189 : vector<8x1xf32>
    %cst_70 = arith.constant 5.000000e-01 : f32
    %191 = vector.broadcast %cst_70 : f32 to vector<8x1xf32>
    %192 = arith.mulf %191, %190 : vector<8x1xf32>
    %193 = vector.broadcast %192 : vector<8x1xf32> to vector<8x128xf32>
    %194 = arith.cmpf oge, %60, %193 : vector<8x128xf32>
    %cst_71 = arith.constant 1.000000e+00 : f32
    %cst_72 = arith.constant 0.000000e+00 : f32
    %195 = vector.broadcast %cst_71 : f32 to vector<8x128xf32>
    %196 = vector.broadcast %cst_72 : f32 to vector<8x128xf32>
    %197 = arith.select %194, %195, %196 : vector<8x128xi1>, vector<8x128xf32>
    %cst_73 = arith.constant dense<0.000000e+00> : vector<8xf32>
    %198 = vector.multi_reduction <add>, %197, %cst_73 [1] : vector<8x128xf32> to vector<8xf32>
    %199 = vector.shape_cast %198 : vector<8xf32> to vector<8x1xf32>
    %cst_74 = arith.constant 5.000000e+01 : f32
    %200 = vector.broadcast %cst_74 : f32 to vector<8x1xf32>
    %201 = arith.cmpf oge, %199, %200 : vector<8x1xf32>
    %202 = arith.select %201, %192, %188 : vector<8x1xi1>, vector<8x1xf32>
    %203 = arith.select %201, %189, %192 : vector<8x1xi1>, vector<8x1xf32>
    %c10_i32 = arith.constant 10 : i32
    %204 = arith.addf %202, %203 : vector<8x1xf32>
    %cst_75 = arith.constant 5.000000e-01 : f32
    %205 = vector.broadcast %cst_75 : f32 to vector<8x1xf32>
    %206 = arith.mulf %205, %204 : vector<8x1xf32>
    %207 = vector.broadcast %206 : vector<8x1xf32> to vector<8x128xf32>
    %208 = arith.cmpf oge, %60, %207 : vector<8x128xf32>
    %cst_76 = arith.constant 1.000000e+00 : f32
    %cst_77 = arith.constant 0.000000e+00 : f32
    %209 = vector.broadcast %cst_76 : f32 to vector<8x128xf32>
    %210 = vector.broadcast %cst_77 : f32 to vector<8x128xf32>
    %211 = arith.select %208, %209, %210 : vector<8x128xi1>, vector<8x128xf32>
    %cst_78 = arith.constant dense<0.000000e+00> : vector<8xf32>
    %212 = vector.multi_reduction <add>, %211, %cst_78 [1] : vector<8x128xf32> to vector<8xf32>
    %213 = vector.shape_cast %212 : vector<8xf32> to vector<8x1xf32>
    %cst_79 = arith.constant 5.000000e+01 : f32
    %214 = vector.broadcast %cst_79 : f32 to vector<8x1xf32>
    %215 = arith.cmpf oge, %213, %214 : vector<8x1xf32>
    %216 = arith.select %215, %206, %202 : vector<8x1xi1>, vector<8x1xf32>
    %217 = arith.select %215, %203, %206 : vector<8x1xi1>, vector<8x1xf32>
    %c11_i32 = arith.constant 11 : i32
    %218 = arith.addf %216, %217 : vector<8x1xf32>
    %cst_80 = arith.constant 5.000000e-01 : f32
    %219 = vector.broadcast %cst_80 : f32 to vector<8x1xf32>
    %220 = arith.mulf %219, %218 : vector<8x1xf32>
    %221 = vector.broadcast %220 : vector<8x1xf32> to vector<8x128xf32>
    %222 = arith.cmpf oge, %60, %221 : vector<8x128xf32>
    %cst_81 = arith.constant 1.000000e+00 : f32
    %cst_82 = arith.constant 0.000000e+00 : f32
    %223 = vector.broadcast %cst_81 : f32 to vector<8x128xf32>
    %224 = vector.broadcast %cst_82 : f32 to vector<8x128xf32>
    %225 = arith.select %222, %223, %224 : vector<8x128xi1>, vector<8x128xf32>
    %cst_83 = arith.constant dense<0.000000e+00> : vector<8xf32>
    %226 = vector.multi_reduction <add>, %225, %cst_83 [1] : vector<8x128xf32> to vector<8xf32>
    %227 = vector.shape_cast %226 : vector<8xf32> to vector<8x1xf32>
    %cst_84 = arith.constant 5.000000e+01 : f32
    %228 = vector.broadcast %cst_84 : f32 to vector<8x1xf32>
    %229 = arith.cmpf oge, %227, %228 : vector<8x1xf32>
    %230 = arith.select %229, %220, %216 : vector<8x1xi1>, vector<8x1xf32>
    %231 = arith.select %229, %217, %220 : vector<8x1xi1>, vector<8x1xf32>
    %c12_i32 = arith.constant 12 : i32
    %232 = arith.addf %230, %231 : vector<8x1xf32>
    %cst_85 = arith.constant 5.000000e-01 : f32
    %233 = vector.broadcast %cst_85 : f32 to vector<8x1xf32>
    %234 = arith.mulf %233, %232 : vector<8x1xf32>
    %235 = vector.broadcast %234 : vector<8x1xf32> to vector<8x128xf32>
    %236 = arith.cmpf oge, %60, %235 : vector<8x128xf32>
    %cst_86 = arith.constant 1.000000e+00 : f32
    %cst_87 = arith.constant 0.000000e+00 : f32
    %237 = vector.broadcast %cst_86 : f32 to vector<8x128xf32>
    %238 = vector.broadcast %cst_87 : f32 to vector<8x128xf32>
    %239 = arith.select %236, %237, %238 : vector<8x128xi1>, vector<8x128xf32>
    %cst_88 = arith.constant dense<0.000000e+00> : vector<8xf32>
    %240 = vector.multi_reduction <add>, %239, %cst_88 [1] : vector<8x128xf32> to vector<8xf32>
    %241 = vector.shape_cast %240 : vector<8xf32> to vector<8x1xf32>
    %cst_89 = arith.constant 5.000000e+01 : f32
    %242 = vector.broadcast %cst_89 : f32 to vector<8x1xf32>
    %243 = arith.cmpf oge, %241, %242 : vector<8x1xf32>
    %244 = arith.select %243, %234, %230 : vector<8x1xi1>, vector<8x1xf32>
    %245 = arith.select %243, %231, %234 : vector<8x1xi1>, vector<8x1xf32>
    %c13_i32 = arith.constant 13 : i32
    %246 = arith.addf %244, %245 : vector<8x1xf32>
    %cst_90 = arith.constant 5.000000e-01 : f32
    %247 = vector.broadcast %cst_90 : f32 to vector<8x1xf32>
    %248 = arith.mulf %247, %246 : vector<8x1xf32>
    %249 = vector.broadcast %248 : vector<8x1xf32> to vector<8x128xf32>
    %250 = arith.cmpf oge, %60, %249 : vector<8x128xf32>
    %cst_91 = arith.constant 1.000000e+00 : f32
    %cst_92 = arith.constant 0.000000e+00 : f32
    %251 = vector.broadcast %cst_91 : f32 to vector<8x128xf32>
    %252 = vector.broadcast %cst_92 : f32 to vector<8x128xf32>
    %253 = arith.select %250, %251, %252 : vector<8x128xi1>, vector<8x128xf32>
    %cst_93 = arith.constant dense<0.000000e+00> : vector<8xf32>
    %254 = vector.multi_reduction <add>, %253, %cst_93 [1] : vector<8x128xf32> to vector<8xf32>
    %255 = vector.shape_cast %254 : vector<8xf32> to vector<8x1xf32>
    %cst_94 = arith.constant 5.000000e+01 : f32
    %256 = vector.broadcast %cst_94 : f32 to vector<8x1xf32>
    %257 = arith.cmpf oge, %255, %256 : vector<8x1xf32>
    %258 = arith.select %257, %248, %244 : vector<8x1xi1>, vector<8x1xf32>
    %259 = arith.select %257, %245, %248 : vector<8x1xi1>, vector<8x1xf32>
    %c14_i32 = arith.constant 14 : i32
    %260 = arith.addf %258, %259 : vector<8x1xf32>
    %cst_95 = arith.constant 5.000000e-01 : f32
    %261 = vector.broadcast %cst_95 : f32 to vector<8x1xf32>
    %262 = arith.mulf %261, %260 : vector<8x1xf32>
    %263 = vector.broadcast %262 : vector<8x1xf32> to vector<8x128xf32>
    %264 = arith.cmpf oge, %60, %263 : vector<8x128xf32>
    %cst_96 = arith.constant 1.000000e+00 : f32
    %cst_97 = arith.constant 0.000000e+00 : f32
    %265 = vector.broadcast %cst_96 : f32 to vector<8x128xf32>
    %266 = vector.broadcast %cst_97 : f32 to vector<8x128xf32>
    %267 = arith.select %264, %265, %266 : vector<8x128xi1>, vector<8x128xf32>
    %cst_98 = arith.constant dense<0.000000e+00> : vector<8xf32>
    %268 = vector.multi_reduction <add>, %267, %cst_98 [1] : vector<8x128xf32> to vector<8xf32>
    %269 = vector.shape_cast %268 : vector<8xf32> to vector<8x1xf32>
    %cst_99 = arith.constant 5.000000e+01 : f32
    %270 = vector.broadcast %cst_99 : f32 to vector<8x1xf32>
    %271 = arith.cmpf oge, %269, %270 : vector<8x1xf32>
    %272 = arith.select %271, %262, %258 : vector<8x1xi1>, vector<8x1xf32>
    %273 = arith.select %271, %259, %262 : vector<8x1xi1>, vector<8x1xf32>
    %c15_i32 = arith.constant 15 : i32
    %274 = arith.addf %272, %273 : vector<8x1xf32>
    %cst_100 = arith.constant 5.000000e-01 : f32
    %275 = vector.broadcast %cst_100 : f32 to vector<8x1xf32>
    %276 = arith.mulf %275, %274 : vector<8x1xf32>
    %277 = vector.broadcast %276 : vector<8x1xf32> to vector<8x128xf32>
    %278 = arith.cmpf oge, %60, %277 : vector<8x128xf32>
    %cst_101 = arith.constant 1.000000e+00 : f32
    %cst_102 = arith.constant 0.000000e+00 : f32
    %279 = vector.broadcast %cst_101 : f32 to vector<8x128xf32>
    %280 = vector.broadcast %cst_102 : f32 to vector<8x128xf32>
    %281 = arith.select %278, %279, %280 : vector<8x128xi1>, vector<8x128xf32>
    %cst_103 = arith.constant dense<0.000000e+00> : vector<8xf32>
    %282 = vector.multi_reduction <add>, %281, %cst_103 [1] : vector<8x128xf32> to vector<8xf32>
    %283 = vector.shape_cast %282 : vector<8xf32> to vector<8x1xf32>
    %cst_104 = arith.constant 5.000000e+01 : f32
    %284 = vector.broadcast %cst_104 : f32 to vector<8x1xf32>
    %285 = arith.cmpf oge, %283, %284 : vector<8x1xf32>
    %286 = arith.select %285, %276, %272 : vector<8x1xi1>, vector<8x1xf32>
    %287 = arith.select %285, %273, %276 : vector<8x1xi1>, vector<8x1xf32>
    %c16_i32 = arith.constant 16 : i32
    %288 = arith.addf %286, %287 : vector<8x1xf32>
    %cst_105 = arith.constant 5.000000e-01 : f32
    %289 = vector.broadcast %cst_105 : f32 to vector<8x1xf32>
    %290 = arith.mulf %289, %288 : vector<8x1xf32>
    %291 = vector.broadcast %290 : vector<8x1xf32> to vector<8x128xf32>
    %292 = arith.cmpf oge, %60, %291 : vector<8x128xf32>
    %cst_106 = arith.constant 1.000000e+00 : f32
    %cst_107 = arith.constant 0.000000e+00 : f32
    %293 = vector.broadcast %cst_106 : f32 to vector<8x128xf32>
    %294 = vector.broadcast %cst_107 : f32 to vector<8x128xf32>
    %295 = arith.select %292, %293, %294 : vector<8x128xi1>, vector<8x128xf32>
    %cst_108 = arith.constant dense<0.000000e+00> : vector<8xf32>
    %296 = vector.multi_reduction <add>, %295, %cst_108 [1] : vector<8x128xf32> to vector<8xf32>
    %297 = vector.shape_cast %296 : vector<8xf32> to vector<8x1xf32>
    %cst_109 = arith.constant 5.000000e+01 : f32
    %298 = vector.broadcast %cst_109 : f32 to vector<8x1xf32>
    %299 = arith.cmpf oge, %297, %298 : vector<8x1xf32>
    %300 = arith.select %299, %290, %286 : vector<8x1xi1>, vector<8x1xf32>
    %301 = arith.select %299, %287, %290 : vector<8x1xi1>, vector<8x1xf32>
    %c17_i32 = arith.constant 17 : i32
    %302 = arith.addf %300, %301 : vector<8x1xf32>
    %cst_110 = arith.constant 5.000000e-01 : f32
    %303 = vector.broadcast %cst_110 : f32 to vector<8x1xf32>
    %304 = arith.mulf %303, %302 : vector<8x1xf32>
    %305 = vector.broadcast %304 : vector<8x1xf32> to vector<8x128xf32>
    %306 = arith.cmpf oge, %60, %305 : vector<8x128xf32>
    %cst_111 = arith.constant 1.000000e+00 : f32
    %cst_112 = arith.constant 0.000000e+00 : f32
    %307 = vector.broadcast %cst_111 : f32 to vector<8x128xf32>
    %308 = vector.broadcast %cst_112 : f32 to vector<8x128xf32>
    %309 = arith.select %306, %307, %308 : vector<8x128xi1>, vector<8x128xf32>
    %cst_113 = arith.constant dense<0.000000e+00> : vector<8xf32>
    %310 = vector.multi_reduction <add>, %309, %cst_113 [1] : vector<8x128xf32> to vector<8xf32>
    %311 = vector.shape_cast %310 : vector<8xf32> to vector<8x1xf32>
    %cst_114 = arith.constant 5.000000e+01 : f32
    %312 = vector.broadcast %cst_114 : f32 to vector<8x1xf32>
    %313 = arith.cmpf oge, %311, %312 : vector<8x1xf32>
    %314 = arith.select %313, %304, %300 : vector<8x1xi1>, vector<8x1xf32>
    %315 = arith.select %313, %301, %304 : vector<8x1xi1>, vector<8x1xf32>
    %c18_i32 = arith.constant 18 : i32
    %316 = arith.addf %314, %315 : vector<8x1xf32>
    %cst_115 = arith.constant 5.000000e-01 : f32
    %317 = vector.broadcast %cst_115 : f32 to vector<8x1xf32>
    %318 = arith.mulf %317, %316 : vector<8x1xf32>
    %319 = vector.broadcast %318 : vector<8x1xf32> to vector<8x128xf32>
    %320 = arith.cmpf oge, %60, %319 : vector<8x128xf32>
    %cst_116 = arith.constant 1.000000e+00 : f32
    %cst_117 = arith.constant 0.000000e+00 : f32
    %321 = vector.broadcast %cst_116 : f32 to vector<8x128xf32>
    %322 = vector.broadcast %cst_117 : f32 to vector<8x128xf32>
    %323 = arith.select %320, %321, %322 : vector<8x128xi1>, vector<8x128xf32>
    %cst_118 = arith.constant dense<0.000000e+00> : vector<8xf32>
    %324 = vector.multi_reduction <add>, %323, %cst_118 [1] : vector<8x128xf32> to vector<8xf32>
    %325 = vector.shape_cast %324 : vector<8xf32> to vector<8x1xf32>
    %cst_119 = arith.constant 5.000000e+01 : f32
    %326 = vector.broadcast %cst_119 : f32 to vector<8x1xf32>
    %327 = arith.cmpf oge, %325, %326 : vector<8x1xf32>
    %328 = arith.select %327, %318, %314 : vector<8x1xi1>, vector<8x1xf32>
    %329 = arith.select %327, %315, %318 : vector<8x1xi1>, vector<8x1xf32>
    %c19_i32 = arith.constant 19 : i32
    %330 = arith.addf %328, %329 : vector<8x1xf32>
    %cst_120 = arith.constant 5.000000e-01 : f32
    %331 = vector.broadcast %cst_120 : f32 to vector<8x1xf32>
    %332 = arith.mulf %331, %330 : vector<8x1xf32>
    %333 = vector.broadcast %332 : vector<8x1xf32> to vector<8x128xf32>
    %334 = arith.cmpf oge, %60, %333 : vector<8x128xf32>
    %cst_121 = arith.constant 1.000000e+00 : f32
    %cst_122 = arith.constant 0.000000e+00 : f32
    %335 = vector.broadcast %cst_121 : f32 to vector<8x128xf32>
    %336 = vector.broadcast %cst_122 : f32 to vector<8x128xf32>
    %337 = arith.select %334, %335, %336 : vector<8x128xi1>, vector<8x128xf32>
    %cst_123 = arith.constant dense<0.000000e+00> : vector<8xf32>
    %338 = vector.multi_reduction <add>, %337, %cst_123 [1] : vector<8x128xf32> to vector<8xf32>
    %339 = vector.shape_cast %338 : vector<8xf32> to vector<8x1xf32>
    %cst_124 = arith.constant 5.000000e+01 : f32
    %340 = vector.broadcast %cst_124 : f32 to vector<8x1xf32>
    %341 = arith.cmpf oge, %339, %340 : vector<8x1xf32>
    %342 = arith.select %341, %332, %328 : vector<8x1xi1>, vector<8x1xf32>
    %343 = arith.select %341, %329, %332 : vector<8x1xi1>, vector<8x1xf32>
    %c20_i32 = arith.constant 20 : i32
    %344 = arith.addf %342, %343 : vector<8x1xf32>
    %cst_125 = arith.constant 5.000000e-01 : f32
    %345 = vector.broadcast %cst_125 : f32 to vector<8x1xf32>
    %346 = arith.mulf %345, %344 : vector<8x1xf32>
    %347 = vector.broadcast %346 : vector<8x1xf32> to vector<8x128xf32>
    %348 = arith.cmpf oge, %60, %347 : vector<8x128xf32>
    %cst_126 = arith.constant 1.000000e+00 : f32
    %cst_127 = arith.constant 0.000000e+00 : f32
    %349 = vector.broadcast %cst_126 : f32 to vector<8x128xf32>
    %350 = vector.broadcast %cst_127 : f32 to vector<8x128xf32>
    %351 = arith.select %348, %349, %350 : vector<8x128xi1>, vector<8x128xf32>
    %cst_128 = arith.constant dense<0.000000e+00> : vector<8xf32>
    %352 = vector.multi_reduction <add>, %351, %cst_128 [1] : vector<8x128xf32> to vector<8xf32>
    %353 = vector.shape_cast %352 : vector<8xf32> to vector<8x1xf32>
    %cst_129 = arith.constant 5.000000e+01 : f32
    %354 = vector.broadcast %cst_129 : f32 to vector<8x1xf32>
    %355 = arith.cmpf oge, %353, %354 : vector<8x1xf32>
    %356 = arith.select %355, %346, %342 : vector<8x1xi1>, vector<8x1xf32>
    %357 = arith.select %355, %343, %346 : vector<8x1xi1>, vector<8x1xf32>
    %c21_i32 = arith.constant 21 : i32
    %358 = arith.addf %356, %357 : vector<8x1xf32>
    %cst_130 = arith.constant 5.000000e-01 : f32
    %359 = vector.broadcast %cst_130 : f32 to vector<8x1xf32>
    %360 = arith.mulf %359, %358 : vector<8x1xf32>
    %361 = vector.broadcast %360 : vector<8x1xf32> to vector<8x128xf32>
    %362 = arith.cmpf oge, %60, %361 : vector<8x128xf32>
    %cst_131 = arith.constant 1.000000e+00 : f32
    %cst_132 = arith.constant 0.000000e+00 : f32
    %363 = vector.broadcast %cst_131 : f32 to vector<8x128xf32>
    %364 = vector.broadcast %cst_132 : f32 to vector<8x128xf32>
    %365 = arith.select %362, %363, %364 : vector<8x128xi1>, vector<8x128xf32>
    %cst_133 = arith.constant dense<0.000000e+00> : vector<8xf32>
    %366 = vector.multi_reduction <add>, %365, %cst_133 [1] : vector<8x128xf32> to vector<8xf32>
    %367 = vector.shape_cast %366 : vector<8xf32> to vector<8x1xf32>
    %cst_134 = arith.constant 5.000000e+01 : f32
    %368 = vector.broadcast %cst_134 : f32 to vector<8x1xf32>
    %369 = arith.cmpf oge, %367, %368 : vector<8x1xf32>
    %370 = arith.select %369, %360, %356 : vector<8x1xi1>, vector<8x1xf32>
    %371 = arith.select %369, %357, %360 : vector<8x1xi1>, vector<8x1xf32>
    %372 = vector.broadcast %370 : vector<8x1xf32> to vector<8x128xf32>
    %373 = arith.cmpf ogt, %60, %372 : vector<8x128xf32>
    %cst_135 = arith.constant 1.000000e+00 : f32
    %cst_136 = arith.constant 0.000000e+00 : f32
    %374 = vector.broadcast %cst_135 : f32 to vector<8x128xf32>
    %375 = vector.broadcast %cst_136 : f32 to vector<8x128xf32>
    %376 = arith.select %373, %374, %375 : vector<8x128xi1>, vector<8x128xf32>
    %cst_137 = arith.constant dense<0.000000e+00> : vector<8xf32>
    %377 = vector.multi_reduction <add>, %376, %cst_137 [1] : vector<8x128xf32> to vector<8xf32>
    %378 = vector.shape_cast %377 : vector<8xf32> to vector<8x1xf32>
    %379 = vector.broadcast %370 : vector<8x1xf32> to vector<8x128xf32>
    %380 = arith.cmpf oge, %60, %379 : vector<8x128xf32>
    %cst_138 = arith.constant 1.000000e+00 : f32
    %cst_139 = arith.constant 0.000000e+00 : f32
    %381 = vector.broadcast %cst_138 : f32 to vector<8x128xf32>
    %382 = vector.broadcast %cst_139 : f32 to vector<8x128xf32>
    %383 = arith.select %380, %381, %382 : vector<8x128xi1>, vector<8x128xf32>
    %cst_140 = arith.constant dense<0.000000e+00> : vector<8xf32>
    %384 = vector.multi_reduction <add>, %383, %cst_140 [1] : vector<8x128xf32> to vector<8xf32>
    %385 = vector.shape_cast %384 : vector<8xf32> to vector<8x1xf32>
    %386 = arith.subf %385, %378 : vector<8x1xf32>
    %cst_141 = arith.constant 0.000000e+00 : f32
    %387 = vector.broadcast %cst_141 : f32 to vector<8x128xf32>
    %388 = arith.select %373, %27, %387 : vector<8x128xi1>, vector<8x128xf32>
    %cst_142 = arith.constant dense<0.000000e+00> : vector<8xf32>
    %389 = vector.multi_reduction <add>, %388, %cst_142 [1] : vector<8x128xf32> to vector<8xf32>
    %390 = vector.shape_cast %389 : vector<8xf32> to vector<8x1xf32>
    %cst_143 = arith.constant 5.000000e+01 : f32
    %391 = vector.broadcast %cst_143 : f32 to vector<8x1xf32>
    %392 = arith.subf %391, %378 : vector<8x1xf32>
    %cst_144 = arith.constant 0.000000e+00 : f32
    %393 = vector.broadcast %cst_144 : f32 to vector<8x1xf32>
    %394 = arith.maximumf %393, %392 : vector<8x1xf32>
    %395 = arith.minimumf %386, %394 : vector<8x1xf32>
    %396 = arith.subf %370, %24 : vector<8x1xf32>
    %397 = math.exp %396 : vector<8x1xf32>
    %398 = arith.mulf %395, %397 : vector<8x1xf32>
    %399 = arith.addf %390, %398 : vector<8x1xf32>
    %400 = arith.addf %43, %399 : vector<8x1xf32>
    %401 = math.log %400 : vector<8x1xf32>
    %402 = arith.addf %24, %401 : vector<8x1xf32>
    %403 = arith.subf %402, %55 : vector<8x1xf32>
    %404 = arith.mulf %11, %403 : vector<8x1xf32>
    %405 = arith.addf %35, %404 : vector<8x1xf32>
    %c0_145 = arith.constant 0 : index
    %c0_146 = arith.constant 0 : index
    %406 = vector.load %arg6[%c0_145, %c0_146] : memref<8x1xf32, #tpu.memory_space<vmem>>, vector<8x1xf32>
    tpu.vector_store %arg6[%c0_145, %c0_146], %405 {strides = array<i32>} : memref<8x1xf32, #tpu.memory_space<vmem>>, vector<8x1xf32>,
    return
  }
  func.func @transform_0(%arg0: i32) -> (i32, i32) {
    %c0_i32 = arith.constant 0 : i32
    %c0_i32_0 = arith.constant 0 : i32
    return %arg0, %c0_i32 : i32, i32
  }
  func.func @transform_1(%arg0: i32) -> (i32, i32) {
    %c0_i32 = arith.constant 0 : i32
    %c0_i32_0 = arith.constant 0 : i32
    %c0_i32_1 = arith.constant 0 : i32
    return %c0_i32, %c0_i32_0 : i32, i32
  }
  func.func @transform_2(%arg0: i32) -> (i32, i32) {
    %c0_i32 = arith.constant 0 : i32
    %c0_i32_0 = arith.constant 0 : i32
    %c0_i32_1 = arith.constant 0 : i32
    return %c0_i32, %c0_i32_0 : i32, i32
  }
  func.func @transform_3(%arg0: i32) -> (i32, i32) {
    %c0_i32 = arith.constant 0 : i32
    %c0_i32_0 = arith.constant 0 : i32
    return %arg0, %c0_i32 : i32, i32
  }
  func.func @transform_4(%arg0: i32) -> (i32, i32) {
    %c0_i32 = arith.constant 0 : i32
    %c0_i32_0 = arith.constant 0 : i32
    return %arg0, %c0_i32 : i32, i32
  }
  func.func @transform_5(%arg0: i32) -> (i32, i32) {
    %c0_i32 = arith.constant 0 : i32
    %c0_i32_0 = arith.constant 0 : i32
    return %arg0, %c0_i32 : i32, i32
  }
}

</mosaic_0001>

<llo_original>
// kernel: tpu_custom_call.1
$region0: #{tpu_custom_call.1}
  #allocation0 [shape = 'u32[]', space=smem, size = 0x4, offset = 0x4, fixed_abs, tag = 'smem constant byte address 0x4 - core index']
  #allocation1 [shape = 'u32[72,128]{1,0:T(1,128)}', space=vmem, size = 0x9000, scoped, tag = 'internal scratch']
  %s0 = inlined_call_operand.vmem [shape: bf16[16,128], index: 0, kind: input, shape index: {}]
  %s1 = inlined_call_operand.hbm [shape: bf16[128,128], index: 1, kind: input, shape index: {}]
  %s2 = inlined_call_operand.vmem [shape: s32[1,128], index: 2, kind: input, shape index: {}]
  %s3 = inlined_call_operand.vmem [shape: s32[16,4], index: 3, kind: input, shape index: {}]
  %s4 = inlined_call_operand.vmem [shape: f32[16,2], index: 4, kind: input, shape index: {}]
  %s5 = inlined_call_operand.vmem [shape: f32[16,1], index: 5, kind: output, shape index: {}]
  %s6 = sld [smem:[#allocation0]]
  $region57: #{tpu_custom_call.1} parent=0
    _
  %s8 = ssub.s32 1, %s6
  %s9 = scalar_select 0, %s8, %s6
  $region1: #{tpu_custom_call.1} parent=0
    #allocation2 [shape = 'u8[32768]{0}', space=vmem, size = 0x8000, scoped, tag = 'input window, operand 1, single buffered']
    #allocation3 [shape = 's32[2]{0}', space=sflag, size = 0x8, scoped, tag = 'scoped memory for tpu_custom_call.1']
    %10 = vsyncpa [#allocation3], 0
    loop: start=0, step=1, limit=4
    $region2: #{tpu_custom_call.1} parent=1 // loop_pre_header
      _
    $region3: #{tpu_custom_call.1} parent=1 // loop_header
      %s12 = sphi 0, %s16
      %p13 = scmp.ge.s32.totalorder %s12, 4
      %s22 = sphi 0, %s24
      %s25 = sphi 0, %s22
      %s26 = sphi 0, %s25
      %s42 = sphi 0, %s26
      %s46 = sphi 0, %s46
      %s48 = sphi 0, %s46
      %s49 = sphi 0, %s48
      %s63 = sphi 0, %s49
      %s67 = sphi 0, %s67
      %s69 = sphi 0, %s67
      %s70 = sphi 0, %s69
      %s84 = sphi 0, %s70
      %s90 = sphi 0, %s92
      %s93 = sphi 0, %s90
      %s94 = sphi 0, %s93
      %s110 = sphi 0, %s94
      %s116 = sphi 0, %s118
      %s119 = sphi 0, %s116
      %s120 = sphi 0, %s119
      %s136 = sphi 0, %s120
      %s142 = sphi 0, %s144
      %s145 = sphi 0, %s142
      %s146 = sphi 0, %s145
      %s162 = sphi 0, %s146
    $region4: #{tpu_custom_call.1} parent=1 // loop_header_branch
      %15 = sbr.rel (%p13) target = $region8
    $region5: #{tpu_custom_call.1} parent=1 // loop_body
      %s17 = ssub.s32 %s12, 1
      %s18 = ssub.s32 %s12, 2
      %s19 = sadd.s32 %s12, 1
      %s20 = ssub.s32 %s12, %s19
      %p21 = scmp.eq.s32.totalorder %s20, 0
      %s23 = sadd.s32 %s22, 1
      %s24 = scalar_select %p21, %s22, %s23
      %p27 = pneg %p21
      %p28 = scmp.eq.s32.totalorder %s12, 1
      %p29 = por %p27, %p28
      %p30 = scmp.ne.s32.totalorder %s22, %s25
      %p31 = scmp.eq.s32.totalorder %s12, 0
      %p32 = por %p30, %p31
      %p33 = scmp.ne.s32.totalorder %s22, %s25
      %p34 = scmp.eq.s32.totalorder %s17, 1
      %p35 = por %p33, %p34
      %p36 = scmp.ne.s32.totalorder %s25, %s26
      %p37 = scmp.eq.s32.totalorder %s17, 0
      %p38 = por %p36, %p37
      %p39 = scmp.ne.s32.totalorder %s25, %s26
      %p40 = scmp.eq.s32.totalorder %s18, 1
      %p41 = por %p39, %p40
      %p43 = scmp.ne.s32.totalorder %s26, %s42
      %p44 = scmp.eq.s32.totalorder %s18, 0
      %p45 = por %p43, %p44
      %s47 = sadd.s32 %s46, 1
      %p50 = scmp.eq.s32.totalorder %s12, 1
      %p51 = scmp.ne.s32.totalorder %s46, %s48
      %p52 = scmp.eq.s32.totalorder %s12, 0
      %p53 = por %p51, %p52
      %p54 = scmp.ne.s32.totalorder %s46, %s48
      %p55 = scmp.eq.s32.totalorder %s17, 1
      %p56 = por %p54, %p55
      %p57 = scmp.ne.s32.totalorder %s48, %s49
      %p58 = scmp.eq.s32.totalorder %s17, 0
      %p59 = por %p57, %p58
      %p60 = scmp.ne.s32.totalorder %s48, %s49
      %p61 = scmp.eq.s32.totalorder %s18, 1
      %p62 = por %p60, %p61
      %p64 = scmp.ne.s32.totalorder %s49, %s63
      %p65 = scmp.eq.s32.totalorder %s18, 0
      %p66 = por %p64, %p65
      %s68 = sadd.s32 %s67, 1
      %p71 = scmp.eq.s32.totalorder %s12, 1
      %p72 = scmp.ne.s32.totalorder %s67, %s69
      %p73 = scmp.eq.s32.totalorder %s12, 0
      %p74 = por %p72, %p73
      %p75 = scmp.ne.s32.totalorder %s67, %s69
      %p76 = scmp.eq.s32.totalorder %s17, 1
      %p77 = por %p75, %p76
      %p78 = scmp.ne.s32.totalorder %s69, %s70
      %p79 = scmp.eq.s32.totalorder %s17, 0
      %p80 = por %p78, %p79
      %p81 = scmp.ne.s32.totalorder %s69, %s70
      %p82 = scmp.eq.s32.totalorder %s18, 1
      %p83 = por %p81, %p82
      %p85 = scmp.ne.s32.totalorder %s70, %s84
      %p86 = scmp.eq.s32.totalorder %s18, 0
      %p87 = por %p85, %p86
      %s88 = ssub.s32 %s12, %s19
      %p89 = scmp.eq.s32.totalorder %s88, 0
      %s91 = sadd.s32 %s90, 1
      %s92 = scalar_select %p89, %s90, %s91
      %p95 = pneg %p89
      %p96 = scmp.eq.s32.totalorder %s12, 1
      %p97 = por %p95, %p96
      %p98 = scmp.ne.s32.totalorder %s90, %s93
      %p99 = scmp.eq.s32.totalorder %s12, 0
      %p100 = por %p98, %p99
      %p101 = scmp.ne.s32.totalorder %s90, %s93
      %p102 = scmp.eq.s32.totalorder %s17, 1
      %p103 = por %p101, %p102
      %p104 = scmp.ne.s32.totalorder %s93, %s94
      %p105 = scmp.eq.s32.totalorder %s17, 0
      %p106 = por %p104, %p105
      %p107 = scmp.ne.s32.totalorder %s93, %s94
      %p108 = scmp.eq.s32.totalorder %s18, 1
      %p109 = por %p107, %p108
      %p111 = scmp.ne.s32.totalorder %s94, %s110
      %p112 = scmp.eq.s32.totalorder %s18, 0
      %p113 = por %p111, %p112
      %s114 = ssub.s32 %s12, %s19
      %p115 = scmp.eq.s32.totalorder %s114, 0
      %s117 = sadd.s32 %s116, 1
      %s118 = scalar_select %p115, %s116, %s117
      %p121 = pneg %p115
      %p122 = scmp.eq.s32.totalorder %s12, 1
      %p123 = por %p121, %p122
      %p124 = scmp.ne.s32.totalorder %s116, %s119
      %p125 = scmp.eq.s32.totalorder %s12, 0
      %p126 = por %p124, %p125
      %p127 = scmp.ne.s32.totalorder %s116, %s119
      %p128 = scmp.eq.s32.totalorder %s17, 1
      %p129 = por %p127, %p128
      %p130 = scmp.ne.s32.totalorder %s119, %s120
      %p131 = scmp.eq.s32.totalorder %s17, 0
      %p132 = por %p130, %p131
      %p133 = scmp.ne.s32.totalorder %s119, %s120
      %p134 = scmp.eq.s32.totalorder %s18, 1
      %p135 = por %p133, %p134
      %p137 = scmp.ne.s32.totalorder %s120, %s136
      %p138 = scmp.eq.s32.totalorder %s18, 0
      %p139 = por %p137, %p138
      %s140 = ssub.s32 %s12, %s19
      %p141 = scmp.eq.s32.totalorder %s140, 0
      %s143 = sadd.s32 %s142, 1
      %s144 = scalar_select %p141, %s142, %s143
      %p147 = pneg %p141
      %p148 = scmp.eq.s32.totalorder %s12, 1
      %p149 = por %p147, %p148
      %p150 = scmp.ne.s32.totalorder %s142, %s145
      %p151 = scmp.eq.s32.totalorder %s12, 0
      %p152 = por %p150, %p151
      %p153 = scmp.ne.s32.totalorder %s142, %s145
      %p154 = scmp.eq.s32.totalorder %s17, 1
      %p155 = por %p153, %p154
      %p156 = scmp.ne.s32.totalorder %s145, %s146
      %p157 = scmp.eq.s32.totalorder %s17, 0
      %p158 = por %p156, %p157
      %p159 = scmp.ne.s32.totalorder %s145, %s146
      %p160 = scmp.eq.s32.totalorder %s18, 1
      %p161 = por %p159, %p160
      %p163 = scmp.ne.s32.totalorder %s146, %s162
      %p164 = scmp.eq.s32.totalorder %s18, 0
      %p165 = por %p163, %p164
      %p166 = scmp.le.s32.totalorder 1, %s12
      %p167 = scmp.lt.s32.totalorder %s12, 3
      %p168 = pnand %p166, %p167
      %p169 = pneg %p168
      // Predicated region
      $region9: #{tpu_custom_call.1} parent=5 // pred_check
        _
      $region10: #{tpu_custom_call.1} parent=5 // pred_check_branch
        %171 = sbr.rel (%p168) target = $region12
      $region11: #{tpu_custom_call.1} parent=5 // pred_region
        %s172 = ssub.s32 %s12, 1
        // Predicated region
        $region13: #{tpu_custom_call.1} parent=11 // pred_check
          %p173 = pneg %p59
        $region14: #{tpu_custom_call.1} parent=11 // pred_check_branch
          %175 = sbr.rel (%p173) target = $region16
        $region15: #{tpu_custom_call.1} parent=11 // pred_region
          %177 = vsyncadd [#allocation3], 0
          %s178 = sshll.u32 %s1, 4
          %s179 = int_to_ptr.hbm [resolvable:$true] %s178
          %s180 = sshll.u32 [#allocation2], 4
          %s181 = int_to_ptr.vmem [resolvable:$true] %s180
          %186 = dma.hbm_to_vmem [thread:$0]  %s179, 1024, %s181, [#allocation3], 64, 64, 4
        $region16: #{tpu_custom_call.1} parent=11 // pred_fallthru
          _
        // Predicated region
        $region17: #{tpu_custom_call.1} parent=11 // pred_check
          %p187 = pneg %p80
        $region18: #{tpu_custom_call.1} parent=11 // pred_check_branch
          %189 = sbr.rel (%p187) target = $region20
        $region19: #{tpu_custom_call.1} parent=11 // pred_region
          _
        $region20: #{tpu_custom_call.1} parent=11 // pred_fallthru
          _
      $region12: #{tpu_custom_call.1} parent=5 // pred_fallthru
        _
      %p190 = scmp.lt.s32.totalorder %s12, 2
      // Predicated region
      $region21: #{tpu_custom_call.1} parent=5 // pred_check
        %p191 = pneg %p190
      $region22: #{tpu_custom_call.1} parent=5 // pred_check_branch
        %193 = sbr.rel (%p191) target = $region24
      $region23: #{tpu_custom_call.1} parent=5 // pred_region
        // Predicated region
        $region25: #{tpu_custom_call.1} parent=23 // pred_check
          %p194 = pneg %p32
        $region26: #{tpu_custom_call.1} parent=23 // pred_check_branch
          %196 = sbr.rel (%p194) target = $region28
        $region27: #{tpu_custom_call.1} parent=23 // pred_region
          %p197 = scmp.lt.s32.totalorder %s12, 1
          %s198 = scalar_select %p197, %s12, 1
          %s199 = smul.addr %s198, 4
          %s200 = scalar_lea.vmem %s0, %s199
        $region28: #{tpu_custom_call.1} parent=23 // pred_fallthru
          _
        // Predicated region
        $region29: #{tpu_custom_call.1} parent=23 // pred_check
          %p201 = pneg %p100
        $region30: #{tpu_custom_call.1} parent=23 // pred_check_branch
          %203 = sbr.rel (%p201) target = $region32
        $region31: #{tpu_custom_call.1} parent=23 // pred_region
          %p204 = scmp.lt.s32.totalorder %s12, 1
          %s205 = scalar_select %p204, %s12, 1
          %s206 = smul.addr %s205, 8
          %s207 = scalar_lea.vmem %s3, %s206
        $region32: #{tpu_custom_call.1} parent=23 // pred_fallthru
          _
        // Predicated region
        $region33: #{tpu_custom_call.1} parent=23 // pred_check
          %p208 = pneg %p126
        $region34: #{tpu_custom_call.1} parent=23 // pred_check_branch
          %210 = sbr.rel (%p208) target = $region36
        $region35: #{tpu_custom_call.1} parent=23 // pred_region
          %p211 = scmp.lt.s32.totalorder %s12, 1
          %s212 = scalar_select %p211, %s12, 1
          %s213 = smul.addr %s212, 8
          %s214 = scalar_lea.vmem %s4, %s213
        $region36: #{tpu_custom_call.1} parent=23 // pred_fallthru
          _
      $region24: #{tpu_custom_call.1} parent=5 // pred_fallthru
        _
      %p215 = scmp.le.s32.totalorder 1, %s12
      %p216 = scmp.lt.s32.totalorder %s12, 3
      %p217 = pnand %p215, %p216
      %p218 = pneg %p217
      // Predicated region
      $region37: #{tpu_custom_call.1} parent=5 // pred_check
        _
      $region38: #{tpu_custom_call.1} parent=5 // pred_check_branch
        %220 = sbr.rel (%p217) target = $region40
      $region39: #{tpu_custom_call.1} parent=5 // pred_region
        %s221 = ssub.s32 %s12, 1
        // Predicated region
        $region41: #{tpu_custom_call.1} parent=39 // pred_check
          %p222 = pneg %p59
        $region42: #{tpu_custom_call.1} parent=39 // pred_check_branch
          %224 = sbr.rel (%p222) target = $region44
        $region43: #{tpu_custom_call.1} parent=39 // pred_region
          %226 = dma.done [#allocation3], 1024
        $region44: #{tpu_custom_call.1} parent=39 // pred_fallthru
          _
        %p227 = scmp.lt.s32.totalorder %s17, 1
        %s228 = scalar_select %p227, %s17, 1
        %s229 = smul.addr %s228, 4
        %s230 = scalar_lea.vmem %s0, %s229
        %p231 = pneg %p38
        %p232 = pneg %p35
        %p233 = pneg %p59
        %p234 = pneg %p56
        %p235 = pneg %p80
        %p236 = pneg %p77
        %p237 = scmp.lt.s32.totalorder %s17, 1
        %s238 = scalar_select %p237, %s17, 1
        %s239 = smul.addr %s238, 8
        %s240 = scalar_lea.vmem %s3, %s239
        %p241 = pneg %p106
        %p242 = pneg %p103
        %p243 = scmp.lt.s32.totalorder %s17, 1
        %s244 = scalar_select %p243, %s17, 1
        %s245 = smul.addr %s244, 8
        %s246 = scalar_lea.vmem %s4, %s245
        %p247 = pneg %p132
        %p248 = pneg %p129
        %p249 = pneg %p158
        %p250 = pneg %p155
        %p251 = scmp.lt.s32.totalorder %s17, 1
        %s252 = scalar_select %p251, %s17, 1
        %s253 = smul.addr %s252, 8
        %s254 = scalar_lea.vmem %s5, %s253
        %p255 = scmp.lt.s32.totalorder %s17, 1
        %s256 = scalar_select %p255, %s17, 1
        %s257 = smul.addr %s256, 4
        %s258 = scalar_lea.vmem %s0, %s257
        %p259 = scmp.lt.s32.totalorder %s17, 1
        %s260 = scalar_select %p259, %s17, 1
        %s261 = smul.addr %s260, 8
        %s262 = scalar_lea.vmem %s3, %s261
        %p263 = scmp.lt.s32.totalorder %s17, 1
        %s264 = scalar_select %p263, %s17, 1
        %s265 = smul.addr %s264, 8
        %s266 = scalar_lea.vmem %s4, %s265
        %p267 = scmp.lt.s32.totalorder %s17, 1
        %s268 = scalar_select %p267, %s17, 1
        %s269 = smul.addr %s268, 8
        %s270 = scalar_lea.vmem %s5, %s269
        %v271 = vld [vmem:[%s258] sm:$0xf]
        %v272 = vld [vmem:[#allocation2] sm:$0xf]
        %v273 = vld [vmem:[#allocation2 + $0x4] sm:$0xf]
        %v274 = vld [vmem:[#allocation2 + $0x8] sm:$0xf]
        %v275 = vld [vmem:[#allocation2 + $0xc] sm:$0xf]
        %v276 = vld [vmem:[#allocation2 + $0x10] sm:$0xf]
        %v277 = vld [vmem:[#allocation2 + $0x14] sm:$0xf]
        %v278 = vld [vmem:[#allocation2 + $0x18] sm:$0xf]
        %v279 = vld [vmem:[#allocation2 + $0x1c] sm:$0xf]
        %v280 = vld [vmem:[#allocation2 + $0x20] sm:$0xf]
        %v281 = vld [vmem:[#allocation2 + $0x24] sm:$0xf]
        %v282 = vld [vmem:[#allocation2 + $0x28] sm:$0xf]
        %v283 = vld [vmem:[#allocation2 + $0x2c] sm:$0xf]
        %v284 = vld [vmem:[#allocation2 + $0x30] sm:$0xf]
        %v285 = vld [vmem:[#allocation2 + $0x34] sm:$0xf]
        %v286 = vld [vmem:[#allocation2 + $0x38] sm:$0xf]
        %v287 = vld [vmem:[#allocation2 + $0x3c] sm:$0xf]
        %v304 = vunpack.c.l.b16 %v272
        %v305 = vunpack.c.l.b16 %v273
        %v306 = vunpack.c.l.b16 %v274
        %v307 = vunpack.c.l.b16 %v275
        %v308 = vunpack.c.l.b16 %v276
        %v309 = vunpack.c.l.b16 %v277
        %v310 = vunpack.c.l.b16 %v278
        %v311 = vunpack.c.l.b16 %v279
        %v312 = vunpack.c.l.b16 %v280
        %v313 = vunpack.c.l.b16 %v281
        %v314 = vunpack.c.l.b16 %v282
        %v315 = vunpack.c.l.b16 %v283
        %v316 = vunpack.c.l.b16 %v284
        %v317 = vunpack.c.l.b16 %v285
        %v318 = vunpack.c.l.b16 %v286
        %v319 = vunpack.c.l.b16 %v287
        %v320 = vpack.c.b16 %v305, %v304
        %v321 = vpack.c.b16 %v307, %v306
        %v322 = vpack.c.b16 %v309, %v308
        %v323 = vpack.c.b16 %v311, %v310
        %v324 = vpack.c.b16 %v313, %v312
        %v325 = vpack.c.b16 %v315, %v314
        %v326 = vpack.c.b16 %v317, %v316
        %v327 = vpack.c.b16 %v319, %v318
        %336 = vmatpush.bf16.msra.mxu0 %v327
        %337 = vmatpush.bf16.msra.mxu0 %v326
        %338 = vmatpush.bf16.msra.mxu0 %v325
        %339 = vmatpush.bf16.msra.mxu0 %v324
        %340 = vmatpush.bf16.msra.mxu0 %v323
        %341 = vmatpush.bf16.msra.mxu0 %v322
        %342 = vmatpush.bf16.msra.mxu0 %v321
        %343 = vmatpush.bf16.msra.mxu0 %v320
        %344 = vmatmul.bf16.gmra.mxu0 %v271
        %v345 = vpop.f32.mrf.mxu0
        %v346 = vadd.f32 0.0, %v345
        %v347 = vpop.f32.mrf.mxu0
        %348 = vdwg.mxu0
        %v349 = vlaneseq
        %v350 = vand.u32 %v349, 127
        %v351 = vld [vmem:[%s262] sm:$0xff]
        %v352 = vld [vmem:[%s266] sm:$0xff]
        %353 = vset.pattern.permute.xlu0 1
        %354 = vperm.xlu0 %353, %v351
        %v355 = vpop.permute.xlu0 %354
        %vm356 = vcmp.ge.s32.totalorder %v350, %v355
        %357 = vset.pattern.permute.xlu0 2
        %358 = vperm.xlu0 %357, %v351
        %v359 = vpop.permute.xlu0 %358
        %vm360 = vcmp.lt.s32.totalorder %v350, %v359
        %vm361 = vmand %vm356, %vm360
        %362 = vset.pattern.permute.xlu0 0
        %363 = vperm.xlu0 %362, %v351
        %v364 = vpop.permute.xlu0 %363
        %vm365 = vcmp.eq.s32.totalorder %v350, %v364
        %v366 = vsel %vm365, %v346, 0.0
        %367 = vadd.xlane.f32.xlu0 %v366
        %v368 = vpop.xlane.xlu0 %367
        %369 = vmax.xlane.f32.xlu0 %v346
        %v370 = vpop.xlane.xlu0 %369
        %v371 = vsub.f32 %v346, %v370
        %v372 = vmul.f32 %v371, 1.442695
        %v373 = vpow.pop %v372
        %v374 = vsel %vm361, %v373, 0.0
        %375 = vadd.xlane.f32.xlu0 %v374
        %v376 = vpop.xlane.xlu0 %375
        %v377 = vlog2.pop %v376
        %v378 = vmul.f32 %v377, 0.6931472
        %v379 = vadd.f32 %v370, %v378
        %v380 = vsub.f32 %v379, %v368
        %v381 = vmul.f32 %v352, %v380
        %v382 = vld [vmem:[%s2] sm:$0x1]
        %v383 = vperm.slane %v382, 0
        %384 = vset.pattern.permute.xlu0 3
        %385 = vperm.xlu0 %384, %v351
        %v386 = vpop.permute.xlu0 %385
        %vm387 = vcmp.eq.s32.totalorder %v383, %v386
        %v388 = vsel %vm387, %v373, 0.0
        %389 = vadd.xlane.f32.xlu0 %v388
        %v390 = vpop.xlane.xlu0 %389
        %v391 = vsel %vm387, 1.0, 0.0
        %392 = vadd.xlane.f32.xlu0 %v391
        %v393 = vpop.xlane.xlu0 %392
        %v394 = vsel %vm387, %v346, 0.0
        %395 = vadd.xlane.f32.xlu0 %v394
        %v396 = vpop.xlane.xlu0 %395
        %v397 = vmax.f32 %v393, 1.0
        %v398 = vrcp.pop %v397
        %v399 = vmul.f32 %v397, %v398
        %v400 = vsub.f32 1.0, %v399
        %v401 = vmul.f32 %v398, %v400
        %v402 = vadd.f32 %v398, %v401
        %vm403 = vweird.f32 %v397
        %vm404 = vweird.f32 %v398
        %vm405 = vmor %vm403, %vm404
        %v406 = vsel %vm405, %v398, %v402
        %v407 = vand.u32 2147483647, %v397
        %vm408 = vcmp.eq.f32.partialorder %v407, 8.507059e+37
        %v409 = vand.u32 %v397, 2147483648
        %v410 = vor.u32 1.1754944e-38, %v409
        %v411 = vsel %vm408, %v410, %v406
        %v412 = vmul.f32 %v396, %v411
        %vm413 = vcmp.ge.s32.totalorder %v350, 80
        %vm414 = vmor %vm387, %vm413
        %v415 = vsel %vm414, -1e+30, %v346
        %v416 = vadd.f32 %v370, 1.0
        %v417 = vadd.f32 %v416, -21.0
        %v418 = vmul.f32 %v417, 0.5
        %vm419 = vcmp.ge.f32.partialorder %v415, %v418
        %v420 = vsel %vm419, 1.0, 0.0
        %421 = vadd.xlane.f32.xlu0 %v420
        %v422 = vpop.xlane.xlu0 %421
        %vm423 = vcmp.ge.f32.partialorder %v422, 50.0
        %v424 = vsel %vm423, %v418, -21.0
        %v425 = vsel %vm423, %v416, %v418
        %v426 = vadd.f32 %v424, %v425
        %v427 = vmul.f32 %v426, 0.5
        %vm428 = vcmp.ge.f32.partialorder %v415, %v427
        %v429 = vsel %vm428, 1.0, 0.0
        %430 = vadd.xlane.f32.xlu0 %v429
        %v431 = vpop.xlane.xlu0 %430
        %vm432 = vcmp.ge.f32.partialorder %v431, 50.0
        %v433 = vsel %vm432, %v427, %v424
        %v434 = vsel %vm432, %v425, %v427
        %v435 = vadd.f32 %v433, %v434
        %v436 = vmul.f32 %v435, 0.5
        %vm437 = vcmp.ge.f32.partialorder %v415, %v436
        %v438 = vsel %vm437, 1.0, 0.0
        %439 = vadd.xlane.f32.xlu0 %v438
        %v440 = vpop.xlane.xlu0 %439
        %vm441 = vcmp.ge.f32.partialorder %v440, 50.0
        %v442 = vsel %vm441, %v436, %v433
        %v443 = vsel %vm441, %v434, %v436
        %v444 = vadd.f32 %v442, %v443
        %v445 = vmul.f32 %v444, 0.5
        %vm446 = vcmp.ge.f32.partialorder %v415, %v445
        %v447 = vsel %vm446, 1.0, 0.0
        %448 = vadd.xlane.f32.xlu0 %v447
        %v449 = vpop.xlane.xlu0 %448
        %vm450 = vcmp.ge.f32.partialorder %v449, 50.0
        %v451 = vsel %vm450, %v445, %v442
        %v452 = vsel %vm450, %v443, %v445
        %v453 = vadd.f32 %v451, %v452
        %v454 = vmul.f32 %v453, 0.5
        %vm455 = vcmp.ge.f32.partialorder %v415, %v454
        %v456 = vsel %vm455, 1.0, 0.0
        %457 = vadd.xlane.f32.xlu0 %v456
        %v458 = vpop.xlane.xlu0 %457
        %vm459 = vcmp.ge.f32.partialorder %v458, 50.0
        %v460 = vsel %vm459, %v454, %v451
        %v461 = vsel %vm459, %v452, %v454
        %v462 = vadd.f32 %v460, %v461
        %v463 = vmul.f32 %v462, 0.5
        %vm464 = vcmp.ge.f32.partialorder %v415, %v463
        %v465 = vsel %vm464, 1.0, 0.0
        %466 = vadd.xlane.f32.xlu0 %v465
        %v467 = vpop.xlane.xlu0 %466
        %vm468 = vcmp.ge.f32.partialorder %v467, 50.0
        %v469 = vsel %vm468, %v463, %v460
        %v470 = vsel %vm468, %v461, %v463
        %v471 = vadd.f32 %v469, %v470
        %v472 = vmul.f32 %v471, 0.5
        %vm473 = vcmp.ge.f32.partialorder %v415, %v472
        %v474 = vsel %vm473, 1.0, 0.0
        %475 = vadd.xlane.f32.xlu0 %v474
        %v476 = vpop.xlane.xlu0 %475
        %vm477 = vcmp.ge.f32.partialorder %v476, 50.0
        %v478 = vsel %vm477, %v472, %v469
        %v479 = vsel %vm477, %v470, %v472
        %v480 = vadd.f32 %v478, %v479
        %v481 = vmul.f32 %v480, 0.5
        %vm482 = vcmp.ge.f32.partialorder %v415, %v481
        %v483 = vsel %vm482, 1.0, 0.0
        %484 = vadd.xlane.f32.xlu0 %v483
        %v485 = vpop.xlane.xlu0 %484
        %vm486 = vcmp.ge.f32.partialorder %v485, 50.0
        %v487 = vsel %vm486, %v481, %v478
        %v488 = vsel %vm486, %v479, %v481
        %v489 = vadd.f32 %v487, %v488
        %v490 = vmul.f32 %v489, 0.5
        %vm491 = vcmp.ge.f32.partialorder %v415, %v490
        %v492 = vsel %vm491, 1.0, 0.0
        %493 = vadd.xlane.f32.xlu0 %v492
        %v494 = vpop.xlane.xlu0 %493
        %vm495 = vcmp.ge.f32.partialorder %v494, 50.0
        %v496 = vsel %vm495, %v490, %v487
        %v497 = vsel %vm495, %v488, %v490
        %v498 = vadd.f32 %v496, %v497
        %v499 = vmul.f32 %v498, 0.5
        %vm500 = vcmp.ge.f32.partialorder %v415, %v499
        %v501 = vsel %vm500, 1.0, 0.0
        %502 = vadd.xlane.f32.xlu0 %v501
        %v503 = vpop.xlane.xlu0 %502
        %vm504 = vcmp.ge.f32.partialorder %v503, 50.0
        %v505 = vsel %vm504, %v499, %v496
        %v506 = vsel %vm504, %v497, %v499
        %v507 = vadd.f32 %v505, %v506
        %v508 = vmul.f32 %v507, 0.5
        %vm509 = vcmp.ge.f32.partialorder %v415, %v508
        %v510 = vsel %vm509, 1.0, 0.0
        %511 = vadd.xlane.f32.xlu0 %v510
        %v512 = vpop.xlane.xlu0 %511
        %vm513 = vcmp.ge.f32.partialorder %v512, 50.0
        %v514 = vsel %vm513, %v508, %v505
        %v515 = vsel %vm513, %v506, %v508
        %v516 = vadd.f32 %v514, %v515
        %v517 = vmul.f32 %v516, 0.5
        %vm518 = vcmp.ge.f32.partialorder %v415, %v517
        %v519 = vsel %vm518, 1.0, 0.0
        %520 = vadd.xlane.f32.xlu0 %v519
        %v521 = vpop.xlane.xlu0 %520
        %vm522 = vcmp.ge.f32.partialorder %v521, 50.0
        %v523 = vsel %vm522, %v517, %v514
        %v524 = vsel %vm522, %v515, %v517
        %v525 = vadd.f32 %v523, %v524
        %v526 = vmul.f32 %v525, 0.5
        %vm527 = vcmp.ge.f32.partialorder %v415, %v526
        %v528 = vsel %vm527, 1.0, 0.0
        %529 = vadd.xlane.f32.xlu0 %v528
        %v530 = vpop.xlane.xlu0 %529
        %vm531 = vcmp.ge.f32.partialorder %v530, 50.0
        %v532 = vsel %vm531, %v526, %v523
        %v533 = vsel %vm531, %v524, %v526
        %v534 = vadd.f32 %v532, %v533
        %v535 = vmul.f32 %v534, 0.5
        %vm536 = vcmp.ge.f32.partialorder %v415, %v535
        %v537 = vsel %vm536, 1.0, 0.0
        %538 = vadd.xlane.f32.xlu0 %v537
        %v539 = vpop.xlane.xlu0 %538
        %vm540 = vcmp.ge.f32.partialorder %v539, 50.0
        %v541 = vsel %vm540, %v535, %v532
        %v542 = vsel %vm540, %v533, %v535
        %v543 = vadd.f32 %v541, %v542
        %v544 = vmul.f32 %v543, 0.5
        %vm545 = vcmp.ge.f32.partialorder %v415, %v544
        %v546 = vsel %vm545, 1.0, 0.0
        %547 = vadd.xlane.f32.xlu0 %v546
        %v548 = vpop.xlane.xlu0 %547
        %vm549 = vcmp.ge.f32.partialorder %v548, 50.0
        %v550 = vsel %vm549, %v544, %v541
        %v551 = vsel %vm549, %v542, %v544
        %v552 = vadd.f32 %v550, %v551
        %v553 = vmul.f32 %v552, 0.5
        %vm554 = vcmp.ge.f32.partialorder %v415, %v553
        %v555 = vsel %vm554, 1.0, 0.0
        %556 = vadd.xlane.f32.xlu0 %v555
        %v557 = vpop.xlane.xlu0 %556
        %vm558 = vcmp.ge.f32.partialorder %v557, 50.0
        %v559 = vsel %vm558, %v553, %v550
        %v560 = vsel %vm558, %v551, %v553
        %v561 = vadd.f32 %v559, %v560
        %v562 = vmul.f32 %v561, 0.5
        %vm563 = vcmp.ge.f32.partialorder %v415, %v562
        %v564 = vsel %vm563, 1.0, 0.0
        %565 = vadd.xlane.f32.xlu0 %v564
        %v566 = vpop.xlane.xlu0 %565
        %vm567 = vcmp.ge.f32.partialorder %v566, 50.0
        %v568 = vsel %vm567, %v562, %v559
        %v569 = vsel %vm567, %v560, %v562
        %v570 = vadd.f32 %v568, %v569
        %v571 = vmul.f32 %v570, 0.5
        %vm572 = vcmp.ge.f32.partialorder %v415, %v571
        %v573 = vsel %vm572, 1.0, 0.0
        %574 = vadd.xlane.f32.xlu0 %v573
        %v575 = vpop.xlane.xlu0 %574
        %vm576 = vcmp.ge.f32.partialorder %v575, 50.0
        %v577 = vsel %vm576, %v571, %v568
        %v578 = vsel %vm576, %v569, %v571
        %v579 = vadd.f32 %v577, %v578
        %v580 = vmul.f32 %v579, 0.5
        %vm581 = vcmp.ge.f32.partialorder %v415, %v580
        %v582 = vsel %vm581, 1.0, 0.0
        %583 = vadd.xlane.f32.xlu0 %v582
        %v584 = vpop.xlane.xlu0 %583
        %vm585 = vcmp.ge.f32.partialorder %v584, 50.0
        %v586 = vsel %vm585, %v580, %v577
        %v587 = vsel %vm585, %v578, %v580
        %v588 = vadd.f32 %v586, %v587
        %v589 = vmul.f32 %v588, 0.5
        %vm590 = vcmp.ge.f32.partialorder %v415, %v589
        %v591 = vsel %vm590, 1.0, 0.0
        %592 = vadd.xlane.f32.xlu0 %v591
        %v593 = vpop.xlane.xlu0 %592
        %vm594 = vcmp.ge.f32.partialorder %v593, 50.0
        %v595 = vsel %vm594, %v589, %v586
        %v596 = vsel %vm594, %v587, %v589
        %v597 = vadd.f32 %v595, %v596
        %v598 = vmul.f32 %v597, 0.5
        %vm599 = vcmp.ge.f32.partialorder %v415, %v598
        %v600 = vsel %vm599, 1.0, 0.0
        %601 = vadd.xlane.f32.xlu0 %v600
        %v602 = vpop.xlane.xlu0 %601
        %vm603 = vcmp.ge.f32.partialorder %v602, 50.0
        %v604 = vsel %vm603, %v598, %v595
        %v605 = vsel %vm603, %v596, %v598
        %v606 = vadd.f32 %v604, %v605
        %v607 = vmul.f32 %v606, 0.5
        %vm608 = vcmp.ge.f32.partialorder %v415, %v607
        %v609 = vsel %vm608, 1.0, 0.0
        %610 = vadd.xlane.f32.xlu0 %v609
        %v611 = vpop.xlane.xlu0 %610
        %vm612 = vcmp.ge.f32.partialorder %v611, 50.0
        %v613 = vsel %vm612, %v607, %v604
        %vm614 = vcmp.gt.f32.partialorder %v415, %v613
        %v615 = vsel %vm614, 1.0, 0.0
        %616 = vadd.xlane.f32.xlu0 %v615
        %v617 = vpop.xlane.xlu0 %616
        %vm618 = vcmp.ge.f32.partialorder %v415, %v613
        %v619 = vsel %vm618, 1.0, 0.0
        %620 = vadd.xlane.f32.xlu0 %v619
        %v621 = vpop.xlane.xlu0 %620
        %v622 = vsub.f32 %v621, %v617
        %v623 = vsel %vm614, %v373, 0.0
        %624 = vadd.xlane.f32.xlu0 %v623
        %v625 = vpop.xlane.xlu0 %624
        %v626 = vsub.f32 50.0, %v617
        %v627 = vmax.f32 %v626, 0.0
        %v628 = vmin.f32 %v622, %v627
        %v629 = vsub.f32 %v613, %v370
        %v630 = vmul.f32 %v629, 1.442695
        %v631 = vpow.pop %v630
        %v632 = vmul.f32 %v628, %v631
        %v633 = vadd.f32 %v625, %v632
        %v634 = vadd.f32 %v390, %v633
        %v635 = vlog2.pop %v634
        %v636 = vmul.f32 %v635, 0.6931472
        %v637 = vadd.f32 %v370, %v636
        %v638 = vsub.f32 %v637, %v412
        %v639 = vmul.f32 %v352, %v638
        %641 = vrot.lane.b32.xlu0 %v639, 127
        %v642 = vpop.permute.xlu0 %641
        %v644 = vadd.f32 %v381, %v642
        %vm645 = vcmask 7168
        %646 = vst.msk [vmem:[%s270] sm:$0xff] %vm645, %v644
        %p647 = scmp.lt.s32.totalorder %s17, 1
        %s648 = scalar_select %p647, %s17, 1
        %s649 = smul.addr %s648, 8
        %s650 = scalar_lea.vmem %s5, %s649
        // Predicated region
        $region45: #{tpu_custom_call.1} parent=39 // pred_check
          %p651 = pneg %p155
        $region46: #{tpu_custom_call.1} parent=39 // pred_check_branch
          %653 = sbr.rel (%p651) target = $region48
        $region47: #{tpu_custom_call.1} parent=39 // pred_region
          _
        $region48: #{tpu_custom_call.1} parent=39 // pred_fallthru
          _
      $region40: #{tpu_custom_call.1} parent=5 // pred_fallthru
        _
      %p654 = scmp.le.s32.totalorder 2, %s12
      // Predicated region
      $region49: #{tpu_custom_call.1} parent=5 // pred_check
        %p655 = pneg %p654
      $region50: #{tpu_custom_call.1} parent=5 // pred_check_branch
        %657 = sbr.rel (%p655) target = $region52
      $region51: #{tpu_custom_call.1} parent=5 // pred_region
        %s658 = ssub.s32 %s12, 2
        // Predicated region
        $region53: #{tpu_custom_call.1} parent=51 // pred_check
          %p659 = pneg %p161
        $region54: #{tpu_custom_call.1} parent=51 // pred_check_branch
          %661 = sbr.rel (%p659) target = $region56
        $region55: #{tpu_custom_call.1} parent=51 // pred_region
          %p662 = scmp.lt.s32.totalorder %s18, 1
          %s663 = scalar_select %p662, %s18, 1
          %s664 = smul.addr %s663, 8
          %s665 = scalar_lea.vmem %s5, %s664
        $region56: #{tpu_custom_call.1} parent=51 // pred_fallthru
          _
      $region52: #{tpu_custom_call.1} parent=5 // pred_fallthru
        _
    $region6: #{tpu_custom_call.1} parent=1 // loop_footer
      %s16 = sadd.s32 1, %s12
    $region7: #{tpu_custom_call.1} parent=1 // loop_footer_branch
      %11 = sbr.rel target = $region3
    $region8: #{tpu_custom_call.1} parent=1 // loop_exit
      _
    %666 = vsyncpa [#allocation3], 1
    %s667 = scalar_lea.sflag [#allocation3], 1
    %668 = vsyncpa %s667, 1

// kernel: tpu_custom_call.1
$region0: #{tpu_custom_call.1}
  #allocation0 [shape = 'u32[]', space=smem, size = 0x4, offset = 0x4, fixed_abs, tag = 'smem constant byte address 0x4 - core index']
  #allocation1 [shape = 'u32[72,128]{1,0:T(1,128)}', space=vmem, size = 0x9000, scoped, tag = 'internal scratch']
  %s0 = inlined_call_operand.vmem [shape: bf16[16,128], index: 0, kind: input, shape index: {}]
  %s1 = inlined_call_operand.hbm [shape: bf16[128,128], index: 1, kind: input, shape index: {}]
  %s2 = inlined_call_operand.vmem [shape: s32[1,128], index: 2, kind: input, shape index: {}]
  %s3 = inlined_call_operand.vmem [shape: s32[16,4], index: 3, kind: input, shape index: {}]
  %s4 = inlined_call_operand.vmem [shape: f32[16,2], index: 4, kind: input, shape index: {}]
  %s5 = inlined_call_operand.vmem [shape: f32[16,1], index: 5, kind: output, shape index: {}]
  %s6 = sld [smem:[#allocation0]]
  $region57: #{tpu_custom_call.1} parent=0
    _
  %s8 = ssub.s32 1, %s6
  %s9 = scalar_select 0, %s8, %s6
  $region1: #{tpu_custom_call.1} parent=0
    #allocation2 [shape = 'u8[32768]{0}', space=vmem, size = 0x8000, scoped, tag = 'input window, operand 1, single buffered']
    #allocation3 [shape = 's32[2]{0}', space=sflag, size = 0x8, scoped, tag = 'scoped memory for tpu_custom_call.1']
    %10 = vsyncpa [#allocation3], 0
    loop: start=0, step=1, limit=4
    $region2: #{tpu_custom_call.1} parent=1 // loop_pre_header
      _
    $region3: #{tpu_custom_call.1} parent=1 // loop_header
      %s12 = sphi 0, %s16
      %p13 = scmp.ge.s32.totalorder %s12, 4
      %s22 = sphi 0, %s24
      %s25 = sphi 0, %s22
      %s26 = sphi 0, %s25
      %s42 = sphi 0, %s26
      %s46 = sphi 0, %s46
      %s48 = sphi 0, %s46
      %s49 = sphi 0, %s48
      %s63 = sphi 0, %s49
      %s67 = sphi 0, %s67
      %s69 = sphi 0, %s67
      %s70 = sphi 0, %s69
      %s84 = sphi 0, %s70
      %s90 = sphi 0, %s92
      %s93 = sphi 0, %s90
      %s94 = sphi 0, %s93
      %s110 = sphi 0, %s94
      %s116 = sphi 0, %s118
      %s119 = sphi 0, %s116
      %s120 = sphi 0, %s119
      %s136 = sphi 0, %s120
      %s142 = sphi 0, %s144
      %s145 = sphi 0, %s142
      %s146 = sphi 0, %s145
      %s162 = sphi 0, %s146
    $region4: #{tpu_custom_call.1} parent=1 // loop_header_branch
      %15 = sbr.rel (%p13) target = $region8
    $region5: #{tpu_custom_call.1} parent=1 // loop_body
      %s17 = ssub.s32 %s12, 1
      %s18 = ssub.s32 %s12, 2
      %s19 = sadd.s32 %s12, 1
      %s20 = ssub.s32 %s12, %s19
      %p21 = scmp.eq.s32.totalorder %s20, 0
      %s23 = sadd.s32 %s22, 1
      %s24 = scalar_select %p21, %s22, %s23
      %p27 = pneg %p21
      %p28 = scmp.eq.s32.totalorder %s12, 1
      %p29 = por %p27, %p28
      %p30 = scmp.ne.s32.totalorder %s22, %s25
      %p31 = scmp.eq.s32.totalorder %s12, 0
      %p32 = por %p30, %p31
      %p33 = scmp.ne.s32.totalorder %s22, %s25
      %p34 = scmp.eq.s32.totalorder %s17, 1
      %p35 = por %p33, %p34
      %p36 = scmp.ne.s32.totalorder %s25, %s26
      %p37 = scmp.eq.s32.totalorder %s17, 0
      %p38 = por %p36, %p37
      %p39 = scmp.ne.s32.totalorder %s25, %s26
      %p40 = scmp.eq.s32.totalorder %s18, 1
      %p41 = por %p39, %p40
      %p43 = scmp.ne.s32.totalorder %s26, %s42
      %p44 = scmp.eq.s32.totalorder %s18, 0
      %p45 = por %p43, %p44
      %s47 = sadd.s32 %s46, 1
      %p50 = scmp.eq.s32.totalorder %s12, 1
      %p51 = scmp.ne.s32.totalorder %s46, %s48
      %p52 = scmp.eq.s32.totalorder %s12, 0
      %p53 = por %p51, %p52
      %p54 = scmp.ne.s32.totalorder %s46, %s48
      %p55 = scmp.eq.s32.totalorder %s17, 1
      %p56 = por %p54, %p55
      %p57 = scmp.ne.s32.totalorder %s48, %s49
      %p58 = scmp.eq.s32.totalorder %s17, 0
      %p59 = por %p57, %p58
      %p60 = scmp.ne.s32.totalorder %s48, %s49
      %p61 = scmp.eq.s32.totalorder %s18, 1
      %p62 = por %p60, %p61
      %p64 = scmp.ne.s32.totalorder %s49, %s63
      %p65 = scmp.eq.s32.totalorder %s18, 0
      %p66 = por %p64, %p65
      %s68 = sadd.s32 %s67, 1
      %p71 = scmp.eq.s32.totalorder %s12, 1
      %p72 = scmp.ne.s32.totalorder %s67, %s69
      %p73 = scmp.eq.s32.totalorder %s12, 0
      %p74 = por %p72, %p73
      %p75 = scmp.ne.s32.totalorder %s67, %s69
      %p76 = scmp.eq.s32.totalorder %s17, 1
      %p77 = por %p75, %p76
      %p78 = scmp.ne.s32.totalorder %s69, %s70
      %p79 = scmp.eq.s32.totalorder %s17, 0
      %p80 = por %p78, %p79
      %p81 = scmp.ne.s32.totalorder %s69, %s70
      %p82 = scmp.eq.s32.totalorder %s18, 1
      %p83 = por %p81, %p82
      %p85 = scmp.ne.s32.totalorder %s70, %s84
      %p86 = scmp.eq.s32.totalorder %s18, 0
      %p87 = por %p85, %p86
      %s88 = ssub.s32 %s12, %s19
      %p89 = scmp.eq.s32.totalorder %s88, 0
      %s91 = sadd.s32 %s90, 1
      %s92 = scalar_select %p89, %s90, %s91
      %p95 = pneg %p89
      %p96 = scmp.eq.s32.totalorder %s12, 1
      %p97 = por %p95, %p96
      %p98 = scmp.ne.s32.totalorder %s90, %s93
      %p99 = scmp.eq.s32.totalorder %s12, 0
      %p100 = por %p98, %p99
      %p101 = scmp.ne.s32.totalorder %s90, %s93
      %p102 = scmp.eq.s32.totalorder %s17, 1
      %p103 = por %p101, %p102
      %p104 = scmp.ne.s32.totalorder %s93, %s94
      %p105 = scmp.eq.s32.totalorder %s17, 0
      %p106 = por %p104, %p105
      %p107 = scmp.ne.s32.totalorder %s93, %s94
      %p108 = scmp.eq.s32.totalorder %s18, 1
      %p109 = por %p107, %p108
      %p111 = scmp.ne.s32.totalorder %s94, %s110
      %p112 = scmp.eq.s32.totalorder %s18, 0
      %p113 = por %p111, %p112
      %s114 = ssub.s32 %s12, %s19
      %p115 = scmp.eq.s32.totalorder %s114, 0
      %s117 = sadd.s32 %s116, 1
      %s118 = scalar_select %p115, %s116, %s117
      %p121 = pneg %p115
      %p122 = scmp.eq.s32.totalorder %s12, 1
      %p123 = por %p121, %p122
      %p124 = scmp.ne.s32.totalorder %s116, %s119
      %p125 = scmp.eq.s32.totalorder %s12, 0
      %p126 = por %p124, %p125
      %p127 = scmp.ne.s32.totalorder %s116, %s119
      %p128 = scmp.eq.s32.totalorder %s17, 1
      %p129 = por %p127, %p128
      %p130 = scmp.ne.s32.totalorder %s119, %s120
      %p131 = scmp.eq.s32.totalorder %s17, 0
      %p132 = por %p130, %p131
      %p133 = scmp.ne.s32.totalorder %s119, %s120
      %p134 = scmp.eq.s32.totalorder %s18, 1
      %p135 = por %p133, %p134
      %p137 = scmp.ne.s32.totalorder %s120, %s136
      %p138 = scmp.eq.s32.totalorder %s18, 0
      %p139 = por %p137, %p138
      %s140 = ssub.s32 %s12, %s19
      %p141 = scmp.eq.s32.totalorder %s140, 0
      %s143 = sadd.s32 %s142, 1
      %s144 = scalar_select %p141, %s142, %s143
      %p147 = pneg %p141
      %p148 = scmp.eq.s32.totalorder %s12, 1
      %p149 = por %p147, %p148
      %p150 = scmp.ne.s32.totalorder %s142, %s145
      %p151 = scmp.eq.s32.totalorder %s12, 0
      %p152 = por %p150, %p151
      %p153 = scmp.ne.s32.totalorder %s142, %s145
      %p154 = scmp.eq.s32.totalorder %s17, 1
      %p155 = por %p153, %p154
      %p156 = scmp.ne.s32.totalorder %s145, %s146
      %p157 = scmp.eq.s32.totalorder %s17, 0
      %p158 = por %p156, %p157
      %p159 = scmp.ne.s32.totalorder %s145, %s146
      %p160 = scmp.eq.s32.totalorder %s18, 1
      %p161 = por %p159, %p160
      %p163 = scmp.ne.s32.totalorder %s146, %s162
      %p164 = scmp.eq.s32.totalorder %s18, 0
      %p165 = por %p163, %p164
      %p166 = scmp.le.s32.totalorder 1, %s12
      %p167 = scmp.lt.s32.totalorder %s12, 3
      %p168 = pnand %p166, %p167
      %p169 = pneg %p168
      // Predicated region
      $region9: #{tpu_custom_call.1} parent=5 // pred_check
        _
      $region10: #{tpu_custom_call.1} parent=5 // pred_check_branch
        %171 = sbr.rel (%p168) target = $region12
      $region11: #{tpu_custom_call.1} parent=5 // pred_region
        %s172 = ssub.s32 %s12, 1
        // Predicated region
        $region13: #{tpu_custom_call.1} parent=11 // pred_check
          %p173 = pneg %p59
        $region14: #{tpu_custom_call.1} parent=11 // pred_check_branch
          %175 = sbr.rel (%p173) target = $region16
        $region15: #{tpu_custom_call.1} parent=11 // pred_region
          %177 = vsyncadd [#allocation3], 0
          %s178 = sshll.u32 %s1, 4
          %s179 = int_to_ptr.hbm [resolvable:$true] %s178
          %s180 = sshll.u32 [#allocation2], 4
          %s181 = int_to_ptr.vmem [resolvable:$true] %s180
          %186 = dma.hbm_to_vmem [thread:$0]  %s179, 1024, %s181, [#allocation3], 64, 64, 4
        $region16: #{tpu_custom_call.1} parent=11 // pred_fallthru
          _
        // Predicated region
        $region17: #{tpu_custom_call.1} parent=11 // pred_check
          %p187 = pneg %p80
        $region18: #{tpu_custom_call.1} parent=11 // pred_check_branch
          %189 = sbr.rel (%p187) target = $region20
        $region19: #{tpu_custom_call.1} parent=11 // pred_region
          _
        $region20: #{tpu_custom_call.1} parent=11 // pred_fallthru
          _
      $region12: #{tpu_custom_call.1} parent=5 // pred_fallthru
        _
      %p190 = scmp.lt.s32.totalorder %s12, 2
      // Predicated region
      $region21: #{tpu_custom_call.1} parent=5 // pred_check
        %p191 = pneg %p190
      $region22: #{tpu_custom_call.1} parent=5 // pred_check_branch
        %193 = sbr.rel (%p191) target = $region24
      $region23: #{tpu_custom_call.1} parent=5 // pred_region
        // Predicated region
        $region25: #{tpu_custom_call.1} parent=23 // pred_check
          %p194 = pneg %p32
        $region26: #{tpu_custom_call.1} parent=23 // pred_check_branch
          %196 = sbr.rel (%p194) target = $region28
        $region27: #{tpu_custom_call.1} parent=23 // pred_region
          %p197 = scmp.lt.s32.totalorder %s12, 1
          %s198 = scalar_select %p197, %s12, 1
          %s199 = smul.addr %s198, 4
          %s200 = scalar_lea.vmem %s0, %s199
        $region28: #{tpu_custom_call.1} parent=23 // pred_fallthru
          _
        // Predicated region
        $region29: #{tpu_custom_call.1} parent=23 // pred_check
          %p201 = pneg %p100
        $region30: #{tpu_custom_call.1} parent=23 // pred_check_branch
          %203 = sbr.rel (%p201) target = $region32
        $region31: #{tpu_custom_call.1} parent=23 // pred_region
          %p204 = scmp.lt.s32.totalorder %s12, 1
          %s205 = scalar_select %p204, %s12, 1
          %s206 = smul.addr %s205, 8
          %s207 = scalar_lea.vmem %s3, %s206
        $region32: #{tpu_custom_call.1} parent=23 // pred_fallthru
          _
        // Predicated region
        $region33: #{tpu_custom_call.1} parent=23 // pred_check
          %p208 = pneg %p126
        $region34: #{tpu_custom_call.1} parent=23 // pred_check_branch
          %210 = sbr.rel (%p208) target = $region36
        $region35: #{tpu_custom_call.1} parent=23 // pred_region
          %p211 = scmp.lt.s32.totalorder %s12, 1
          %s212 = scalar_select %p211, %s12, 1
          %s213 = smul.addr %s212, 8
          %s214 = scalar_lea.vmem %s4, %s213
        $region36: #{tpu_custom_call.1} parent=23 // pred_fallthru
          _
      $region24: #{tpu_custom_call.1} parent=5 // pred_fallthru
        _
      %p215 = scmp.le.s32.totalorder 1, %s12
      %p216 = scmp.lt.s32.totalorder %s12, 3
      %p217 = pnand %p215, %p216
      %p218 = pneg %p217
      // Predicated region
      $region37: #{tpu_custom_call.1} parent=5 // pred_check
        _
      $region38: #{tpu_custom_call.1} parent=5 // pred_check_branch
        %220 = sbr.rel (%p217) target = $region40
      $region39: #{tpu_custom_call.1} parent=5 // pred_region
        %s221 = ssub.s32 %s12, 1
        // Predicated region
        $region41: #{tpu_custom_call.1} parent=39 // pred_check
          %p222 = pneg %p59
        $region42: #{tpu_custom_call.1} parent=39 // pred_check_branch
          %224 = sbr.rel (%p222) target = $region44
        $region43: #{tpu_custom_call.1} parent=39 // pred_region
          %226 = dma.done [#allocation3], 1024
        $region44: #{tpu_custom_call.1} parent=39 // pred_fallthru
          _
        %p227 = scmp.lt.s32.totalorder %s17, 1
        %s228 = scalar_select %p227, %s17, 1
        %s229 = smul.addr %s228, 4
        %s230 = scalar_lea.vmem %s0, %s229
        %p231 = pneg %p38
        %p232 = pneg %p35
        %p233 = pneg %p59
        %p234 = pneg %p56
        %p235 = pneg %p80
        %p236 = pneg %p77
        %p237 = scmp.lt.s32.totalorder %s17, 1
        %s238 = scalar_select %p237, %s17, 1
        %s239 = smul.addr %s238, 8
        %s240 = scalar_lea.vmem %s3, %s239
        %p241 = pneg %p106
        %p242 = pneg %p103
        %p243 = scmp.lt.s32.totalorder %s17, 1
        %s244 = scalar_select %p243, %s17, 1
        %s245 = smul.addr %s244, 8
        %s246 = scalar_lea.vmem %s4, %s245
        %p247 = pneg %p132
        %p248 = pneg %p129
        %p249 = pneg %p158
        %p250 = pneg %p155
        %p251 = scmp.lt.s32.totalorder %s17, 1
        %s252 = scalar_select %p251, %s17, 1
        %s253 = smul.addr %s252, 8
        %s254 = scalar_lea.vmem %s5, %s253
        %p255 = scmp.lt.s32.totalorder %s17, 1
        %s256 = scalar_select %p255, %s17, 1
        %s257 = smul.addr %s256, 4
        %s258 = scalar_lea.vmem %s0, %s257
        %p259 = scmp.lt.s32.totalorder %s17, 1
        %s260 = scalar_select %p259, %s17, 1
        %s261 = smul.addr %s260, 8
        %s262 = scalar_lea.vmem %s3, %s261
        %p263 = scmp.lt.s32.totalorder %s17, 1
        %s264 = scalar_select %p263, %s17, 1
        %s265 = smul.addr %s264, 8
        %s266 = scalar_lea.vmem %s4, %s265
        %p267 = scmp.lt.s32.totalorder %s17, 1
        %s268 = scalar_select %p267, %s17, 1
        %s269 = smul.addr %s268, 8
        %s270 = scalar_lea.vmem %s5, %s269
        %v271 = vld [vmem:[%s258] sm:$0xf]
        %v272 = vld [vmem:[#allocation2] sm:$0xf]
        %v273 = vld [vmem:[#allocation2 + $0x4] sm:$0xf]
        %v274 = vld [vmem:[#allocation2 + $0x8] sm:$0xf]
        %v275 = vld [vmem:[#allocation2 + $0xc] sm:$0xf]
        %v276 = vld [vmem:[#allocation2 + $0x10] sm:$0xf]
        %v277 = vld [vmem:[#allocation2 + $0x14] sm:$0xf]
        %v278 = vld [vmem:[#allocation2 + $0x18] sm:$0xf]
        %v279 = vld [vmem:[#allocation2 + $0x1c] sm:$0xf]
        %v280 = vld [vmem:[#allocation2 + $0x20] sm:$0xf]
        %v281 = vld [vmem:[#allocation2 + $0x24] sm:$0xf]
        %v282 = vld [vmem:[#allocation2 + $0x28] sm:$0xf]
        %v283 = vld [vmem:[#allocation2 + $0x2c] sm:$0xf]
        %v284 = vld [vmem:[#allocation2 + $0x30] sm:$0xf]
        %v285 = vld [vmem:[#allocation2 + $0x34] sm:$0xf]
        %v286 = vld [vmem:[#allocation2 + $0x38] sm:$0xf]
        %v287 = vld [vmem:[#allocation2 + $0x3c] sm:$0xf]
        %v304 = vunpack.c.l.b16 %v272
        %v305 = vunpack.c.l.b16 %v273
        %v306 = vunpack.c.l.b16 %v274
        %v307 = vunpack.c.l.b16 %v275
        %v308 = vunpack.c.l.b16 %v276
        %v309 = vunpack.c.l.b16 %v277
        %v310 = vunpack.c.l.b16 %v278
        %v311 = vunpack.c.l.b16 %v279
        %v312 = vunpack.c.l.b16 %v280
        %v313 = vunpack.c.l.b16 %v281
        %v314 = vunpack.c.l.b16 %v282
        %v315 = vunpack.c.l.b16 %v283
        %v316 = vunpack.c.l.b16 %v284
        %v317 = vunpack.c.l.b16 %v285
        %v318 = vunpack.c.l.b16 %v286
        %v319 = vunpack.c.l.b16 %v287
        %v320 = vpack.c.b16 %v305, %v304
        %v321 = vpack.c.b16 %v307, %v306
        %v322 = vpack.c.b16 %v309, %v308
        %v323 = vpack.c.b16 %v311, %v310
        %v324 = vpack.c.b16 %v313, %v312
        %v325 = vpack.c.b16 %v315, %v314
        %v326 = vpack.c.b16 %v317, %v316
        %v327 = vpack.c.b16 %v319, %v318
        %336 = vmatpush.bf16.msra.mxu0 %v327
        %337 = vmatpush.bf16.msra.mxu0 %v326
        %338 = vmatpush.bf16.msra.mxu0 %v325
        %339 = vmatpush.bf16.msra.mxu0 %v324
        %340 = vmatpush.bf16.msra.mxu0 %v323
        %341 = vmatpush.bf16.msra.mxu0 %v322
        %342 = vmatpush.bf16.msra.mxu0 %v321
        %343 = vmatpush.bf16.msra.mxu0 %v320
        %344 = vmatmul.bf16.gmra.mxu0 %v271
        %v345 = vpop.f32.mrf.mxu0
        %v346 = vadd.f32 0.0, %v345
        %v347 = vpop.f32.mrf.mxu0
        %348 = vdwg.mxu0
        %v349 = vlaneseq
        %v350 = vand.u32 %v349, 127
        %v351 = vld [vmem:[%s262] sm:$0xff]
        %v352 = vld [vmem:[%s266] sm:$0xff]
        %353 = vset.pattern.permute.xlu0 1
        %354 = vperm.xlu0 %353, %v351
        %v355 = vpop.permute.xlu0 %354
        %vm356 = vcmp.ge.s32.totalorder %v350, %v355
        %357 = vset.pattern.permute.xlu0 2
        %358 = vperm.xlu0 %357, %v351
        %v359 = vpop.permute.xlu0 %358
        %vm360 = vcmp.lt.s32.totalorder %v350, %v359
        %vm361 = vmand %vm356, %vm360
        %362 = vset.pattern.permute.xlu0 0
        %363 = vperm.xlu0 %362, %v351
        %v364 = vpop.permute.xlu0 %363
        %vm365 = vcmp.eq.s32.totalorder %v350, %v364
        %v366 = vsel %vm365, %v346, 0.0
        %367 = vadd.xlane.f32.xlu0 %v366
        %v368 = vpop.xlane.xlu0 %367
        %369 = vmax.xlane.f32.xlu0 %v346
        %v370 = vpop.xlane.xlu0 %369
        %v371 = vsub.f32 %v346, %v370
        %v372 = vmul.f32 %v371, 1.442695
        %v373 = vpow.pop %v372
        %v374 = vsel %vm361, %v373, 0.0
        %375 = vadd.xlane.f32.xlu0 %v374
        %v376 = vpop.xlane.xlu0 %375
        %v377 = vlog2.pop %v376
        %v378 = vmul.f32 %v377, 0.6931472
        %v379 = vadd.f32 %v370, %v378
        %v380 = vsub.f32 %v379, %v368
        %v381 = vmul.f32 %v352, %v380
        %v382 = vld [vmem:[%s2] sm:$0x1]
        %v383 = vperm.slane %v382, 0
        %384 = vset.pattern.permute.xlu0 3
        %385 = vperm.xlu0 %384, %v351
        %v386 = vpop.permute.xlu0 %385
        %vm387 = vcmp.eq.s32.totalorder %v383, %v386
        %v388 = vsel %vm387, %v373, 0.0
        %389 = vadd.xlane.f32.xlu0 %v388
        %v390 = vpop.xlane.xlu0 %389
        %v391 = vsel %vm387, 1.0, 0.0
        %392 = vadd.xlane.f32.xlu0 %v391
        %v393 = vpop.xlane.xlu0 %392
        %v394 = vsel %vm387, %v346, 0.0
        %395 = vadd.xlane.f32.xlu0 %v394
        %v396 = vpop.xlane.xlu0 %395
        %v397 = vmax.f32 %v393, 1.0
        %v398 = vrcp.pop %v397
        %v399 = vmul.f32 %v397, %v398
        %v400 = vsub.f32 1.0, %v399
        %v401 = vmul.f32 %v398, %v400
        %v402 = vadd.f32 %v398, %v401
        %vm403 = vweird.f32 %v397
        %vm404 = vweird.f32 %v398
        %vm405 = vmor %vm403, %vm404
        %v406 = vsel %vm405, %v398, %v402
        %v407 = vand.u32 2147483647, %v397
        %vm408 = vcmp.eq.f32.partialorder %v407, 8.507059e+37
        %v409 = vand.u32 %v397, 2147483648
        %v410 = vor.u32 1.1754944e-38, %v409
        %v411 = vsel %vm408, %v410, %v406
        %v412 = vmul.f32 %v396, %v411
        %vm413 = vcmp.ge.s32.totalorder %v350, 80
        %vm414 = vmor %vm387, %vm413
        %v415 = vsel %vm414, -1e+30, %v346
        %v416 = vadd.f32 %v370, 1.0
        %v417 = vadd.f32 %v416, -21.0
        %v418 = vmul.f32 %v417, 0.5
        %vm419 = vcmp.ge.f32.partialorder %v415, %v418
        %v420 = vsel %vm419, 1.0, 0.0
        %421 = vadd.xlane.f32.xlu0 %v420
        %v422 = vpop.xlane.xlu0 %421
        %vm423 = vcmp.ge.f32.partialorder %v422, 50.0
        %v424 = vsel %vm423, %v418, -21.0
        %v425 = vsel %vm423, %v416, %v418
        %v426 = vadd.f32 %v424, %v425
        %v427 = vmul.f32 %v426, 0.5
        %vm428 = vcmp.ge.f32.partialorder %v415, %v427
        %v429 = vsel %vm428, 1.0, 0.0
        %430 = vadd.xlane.f32.xlu0 %v429
        %v431 = vpop.xlane.xlu0 %430
        %vm432 = vcmp.ge.f32.partialorder %v431, 50.0
        %v433 = vsel %vm432, %v427, %v424
        %v434 = vsel %vm432, %v425, %v427
        %v435 = vadd.f32 %v433, %v434
        %v436 = vmul.f32 %v435, 0.5
        %vm437 = vcmp.ge.f32.partialorder %v415, %v436
        %v438 = vsel %vm437, 1.0, 0.0
        %439 = vadd.xlane.f32.xlu0 %v438
        %v440 = vpop.xlane.xlu0 %439
        %vm441 = vcmp.ge.f32.partialorder %v440, 50.0
        %v442 = vsel %vm441, %v436, %v433
        %v443 = vsel %vm441, %v434, %v436
        %v444 = vadd.f32 %v442, %v443
        %v445 = vmul.f32 %v444, 0.5
        %vm446 = vcmp.ge.f32.partialorder %v415, %v445
        %v447 = vsel %vm446, 1.0, 0.0
        %448 = vadd.xlane.f32.xlu0 %v447
        %v449 = vpop.xlane.xlu0 %448
        %vm450 = vcmp.ge.f32.partialorder %v449, 50.0
        %v451 = vsel %vm450, %v445, %v442
        %v452 = vsel %vm450, %v443, %v445
        %v453 = vadd.f32 %v451, %v452
        %v454 = vmul.f32 %v453, 0.5
        %vm455 = vcmp.ge.f32.partialorder %v415, %v454
        %v456 = vsel %vm455, 1.0, 0.0
        %457 = vadd.xlane.f32.xlu0 %v456
        %v458 = vpop.xlane.xlu0 %457
        %vm459 = vcmp.ge.f32.partialorder %v458, 50.0
        %v460 = vsel %vm459, %v454, %v451
        %v461 = vsel %vm459, %v452, %v454
        %v462 = vadd.f32 %v460, %v461
        %v463 = vmul.f32 %v462, 0.5
        %vm464 = vcmp.ge.f32.partialorder %v415, %v463
        %v465 = vsel %vm464, 1.0, 0.0
        %466 = vadd.xlane.f32.xlu0 %v465
        %v467 = vpop.xlane.xlu0 %466
        %vm468 = vcmp.ge.f32.partialorder %v467, 50.0
        %v469 = vsel %vm468, %v463, %v460
        %v470 = vsel %vm468, %v461, %v463
        %v471 = vadd.f32 %v469, %v470
        %v472 = vmul.f32 %v471, 0.5
        %vm473 = vcmp.ge.f32.partialorder %v415, %v472
        %v474 = vsel %vm473, 1.0, 0.0
        %475 = vadd.xlane.f32.xlu0 %v474
        %v476 = vpop.xlane.xlu0 %475
        %vm477 = vcmp.ge.f32.partialorder %v476, 50.0
        %v478 = vsel %vm477, %v472, %v469
        %v479 = vsel %vm477, %v470, %v472
        %v480 = vadd.f32 %v478, %v479
        %v481 = vmul.f32 %v480, 0.5
        %vm482 = vcmp.ge.f32.partialorder %v415, %v481
        %v483 = vsel %vm482, 1.0, 0.0
        %484 = vadd.xlane.f32.xlu0 %v483
        %v485 = vpop.xlane.xlu0 %484
        %vm486 = vcmp.ge.f32.partialorder %v485, 50.0
        %v487 = vsel %vm486, %v481, %v478
        %v488 = vsel %vm486, %v479, %v481
        %v489 = vadd.f32 %v487, %v488
        %v490 = vmul.f32 %v489, 0.5
        %vm491 = vcmp.ge.f32.partialorder %v415, %v490
        %v492 = vsel %vm491, 1.0, 0.0
        %493 = vadd.xlane.f32.xlu0 %v492
        %v494 = vpop.xlane.xlu0 %493
        %vm495 = vcmp.ge.f32.partialorder %v494, 50.0
        %v496 = vsel %vm495, %v490, %v487
        %v497 = vsel %vm495, %v488, %v490
        %v498 = vadd.f32 %v496, %v497
        %v499 = vmul.f32 %v498, 0.5
        %vm500 = vcmp.ge.f32.partialorder %v415, %v499
        %v501 = vsel %vm500, 1.0, 0.0
        %502 = vadd.xlane.f32.xlu0 %v501
        %v503 = vpop.xlane.xlu0 %502
        %vm504 = vcmp.ge.f32.partialorder %v503, 50.0
        %v505 = vsel %vm504, %v499, %v496
        %v506 = vsel %vm504, %v497, %v499
        %v507 = vadd.f32 %v505, %v506
        %v508 = vmul.f32 %v507, 0.5
        %vm509 = vcmp.ge.f32.partialorder %v415, %v508
        %v510 = vsel %vm509, 1.0, 0.0
        %511 = vadd.xlane.f32.xlu0 %v510
        %v512 = vpop.xlane.xlu0 %511
        %vm513 = vcmp.ge.f32.partialorder %v512, 50.0
        %v514 = vsel %vm513, %v508, %v505
        %v515 = vsel %vm513, %v506, %v508
        %v516 = vadd.f32 %v514, %v515
        %v517 = vmul.f32 %v516, 0.5
        %vm518 = vcmp.ge.f32.partialorder %v415, %v517
        %v519 = vsel %vm518, 1.0, 0.0
        %520 = vadd.xlane.f32.xlu0 %v519
        %v521 = vpop.xlane.xlu0 %520
        %vm522 = vcmp.ge.f32.partialorder %v521, 50.0
        %v523 = vsel %vm522, %v517, %v514
        %v524 = vsel %vm522, %v515, %v517
        %v525 = vadd.f32 %v523, %v524
        %v526 = vmul.f32 %v525, 0.5
        %vm527 = vcmp.ge.f32.partialorder %v415, %v526
        %v528 = vsel %vm527, 1.0, 0.0
        %529 = vadd.xlane.f32.xlu0 %v528
        %v530 = vpop.xlane.xlu0 %529
        %vm531 = vcmp.ge.f32.partialorder %v530, 50.0
        %v532 = vsel %vm531, %v526, %v523
        %v533 = vsel %vm531, %v524, %v526
        %v534 = vadd.f32 %v532, %v533
        %v535 = vmul.f32 %v534, 0.5
        %vm536 = vcmp.ge.f32.partialorder %v415, %v535
        %v537 = vsel %vm536, 1.0, 0.0
        %538 = vadd.xlane.f32.xlu0 %v537
        %v539 = vpop.xlane.xlu0 %538
        %vm540 = vcmp.ge.f32.partialorder %v539, 50.0
        %v541 = vsel %vm540, %v535, %v532
        %v542 = vsel %vm540, %v533, %v535
        %v543 = vadd.f32 %v541, %v542
        %v544 = vmul.f32 %v543, 0.5
        %vm545 = vcmp.ge.f32.partialorder %v415, %v544
        %v546 = vsel %vm545, 1.0, 0.0
        %547 = vadd.xlane.f32.xlu0 %v546
        %v548 = vpop.xlane.xlu0 %547
        %vm549 = vcmp.ge.f32.partialorder %v548, 50.0
        %v550 = vsel %vm549, %v544, %v541
        %v551 = vsel %vm549, %v542, %v544
        %v552 = vadd.f32 %v550, %v551
        %v553 = vmul.f32 %v552, 0.5
        %vm554 = vcmp.ge.f32.partialorder %v415, %v553
        %v555 = vsel %vm554, 1.0, 0.0
        %556 = vadd.xlane.f32.xlu0 %v555
        %v557 = vpop.xlane.xlu0 %556
        %vm558 = vcmp.ge.f32.partialorder %v557, 50.0
        %v559 = vsel %vm558, %v553, %v550
        %v560 = vsel %vm558, %v551, %v553
        %v561 = vadd.f32 %v559, %v560
        %v562 = vmul.f32 %v561, 0.5
        %vm563 = vcmp.ge.f32.partialorder %v415, %v562
        %v564 = vsel %vm563, 1.0, 0.0
        %565 = vadd.xlane.f32.xlu0 %v564
        %v566 = vpop.xlane.xlu0 %565
        %vm567 = vcmp.ge.f32.partialorder %v566, 50.0
        %v568 = vsel %vm567, %v562, %v559
        %v569 = vsel %vm567, %v560, %v562
        %v570 = vadd.f32 %v568, %v569
        %v571 = vmul.f32 %v570, 0.5
        %vm572 = vcmp.ge.f32.partialorder %v415, %v571
        %v573 = vsel %vm572, 1.0, 0.0
        %574 = vadd.xlane.f32.xlu0 %v573
        %v575 = vpop.xlane.xlu0 %574
        %vm576 = vcmp.ge.f32.partialorder %v575, 50.0
        %v577 = vsel %vm576, %v571, %v568
        %v578 = vsel %vm576, %v569, %v571
        %v579 = vadd.f32 %v577, %v578
        %v580 = vmul.f32 %v579, 0.5
        %vm581 = vcmp.ge.f32.partialorder %v415, %v580
        %v582 = vsel %vm581, 1.0, 0.0
        %583 = vadd.xlane.f32.xlu0 %v582
        %v584 = vpop.xlane.xlu0 %583
        %vm585 = vcmp.ge.f32.partialorder %v584, 50.0
        %v586 = vsel %vm585, %v580, %v577
        %v587 = vsel %vm585, %v578, %v580
        %v588 = vadd.f32 %v586, %v587
        %v589 = vmul.f32 %v588, 0.5
        %vm590 = vcmp.ge.f32.partialorder %v415, %v589
        %v591 = vsel %vm590, 1.0, 0.0
        %592 = vadd.xlane.f32.xlu0 %v591
        %v593 = vpop.xlane.xlu0 %592
        %vm594 = vcmp.ge.f32.partialorder %v593, 50.0
        %v595 = vsel %vm594, %v589, %v586
        %v596 = vsel %vm594, %v587, %v589
        %v597 = vadd.f32 %v595, %v596
        %v598 = vmul.f32 %v597, 0.5
        %vm599 = vcmp.ge.f32.partialorder %v415, %v598
        %v600 = vsel %vm599, 1.0, 0.0
        %601 = vadd.xlane.f32.xlu0 %v600
        %v602 = vpop.xlane.xlu0 %601
        %vm603 = vcmp.ge.f32.partialorder %v602, 50.0
        %v604 = vsel %vm603, %v598, %v595
        %v605 = vsel %vm603, %v596, %v598
        %v606 = vadd.f32 %v604, %v605
        %v607 = vmul.f32 %v606, 0.5
        %vm608 = vcmp.ge.f32.partialorder %v415, %v607
        %v609 = vsel %vm608, 1.0, 0.0
        %610 = vadd.xlane.f32.xlu0 %v609
        %v611 = vpop.xlane.xlu0 %610
        %vm612 = vcmp.ge.f32.partialorder %v611, 50.0
        %v613 = vsel %vm612, %v607, %v604
        %vm614 = vcmp.gt.f32.partialorder %v415, %v613
        %v615 = vsel %vm614, 1.0, 0.0
        %616 = vadd.xlane.f32.xlu0 %v615
        %v617 = vpop.xlane.xlu0 %616
        %vm618 = vcmp.ge.f32.partialorder %v415, %v613
        %v619 = vsel %vm618, 1.0, 0.0
        %620 = vadd.xlane.f32.xlu0 %v619
        %v621 = vpop.xlane.xlu0 %620
        %v622 = vsub.f32 %v621, %v617
        %v623 = vsel %vm614, %v373, 0.0
        %624 = vadd.xlane.f32.xlu0 %v623
        %v625 = vpop.xlane.xlu0 %624
        %v626 = vsub.f32 50.0, %v617
        %v627 = vmax.f32 %v626, 0.0
        %v628 = vmin.f32 %v622, %v627
        %v629 = vsub.f32 %v613, %v370
        %v630 = vmul.f32 %v629, 1.442695
        %v631 = vpow.pop %v630
        %v632 = vmul.f32 %v628, %v631
        %v633 = vadd.f32 %v625, %v632
        %v634 = vadd.f32 %v390, %v633
        %v635 = vlog2.pop %v634
        %v636 = vmul.f32 %v635, 0.6931472
        %v637 = vadd.f32 %v370, %v636
        %v638 = vsub.f32 %v637, %v412
        %v639 = vmul.f32 %v352, %v638
        %641 = vrot.lane.b32.xlu0 %v639, 127
        %v642 = vpop.permute.xlu0 %641
        %v644 = vadd.f32 %v381, %v642
        %vm645 = vcmask 7168
        %646 = vst.msk [vmem:[%s270] sm:$0xff] %vm645, %v644
        %p647 = scmp.lt.s32.totalorder %s17, 1
        %s648 = scalar_select %p647, %s17, 1
        %s649 = smul.addr %s648, 8
        %s650 = scalar_lea.vmem %s5, %s649
        // Predicated region
        $region45: #{tpu_custom_call.1} parent=39 // pred_check
          %p651 = pneg %p155
        $region46: #{tpu_custom_call.1} parent=39 // pred_check_branch
          %653 = sbr.rel (%p651) target = $region48
        $region47: #{tpu_custom_call.1} parent=39 // pred_region
          _
        $region48: #{tpu_custom_call.1} parent=39 // pred_fallthru
          _
      $region40: #{tpu_custom_call.1} parent=5 // pred_fallthru
        _
      %p654 = scmp.le.s32.totalorder 2, %s12
      // Predicated region
      $region49: #{tpu_custom_call.1} parent=5 // pred_check
        %p655 = pneg %p654
      $region50: #{tpu_custom_call.1} parent=5 // pred_check_branch
        %657 = sbr.rel (%p655) target = $region52
      $region51: #{tpu_custom_call.1} parent=5 // pred_region
        %s658 = ssub.s32 %s12, 2
        // Predicated region
        $region53: #{tpu_custom_call.1} parent=51 // pred_check
          %p659 = pneg %p161
        $region54: #{tpu_custom_call.1} parent=51 // pred_check_branch
          %661 = sbr.rel (%p659) target = $region56
        $region55: #{tpu_custom_call.1} parent=51 // pred_region
          %p662 = scmp.lt.s32.totalorder %s18, 1
          %s663 = scalar_select %p662, %s18, 1
          %s664 = smul.addr %s663, 8
          %s665 = scalar_lea.vmem %s5, %s664
        $region56: #{tpu_custom_call.1} parent=51 // pred_fallthru
          _
      $region52: #{tpu_custom_call.1} parent=5 // pred_fallthru
        _
    $region6: #{tpu_custom_call.1} parent=1 // loop_footer
      %s16 = sadd.s32 1, %s12
    $region7: #{tpu_custom_call.1} parent=1 // loop_footer_branch
      %11 = sbr.rel target = $region3
    $region8: #{tpu_custom_call.1} parent=1 // loop_exit
      _
    %666 = vsyncpa [#allocation3], 1
    %s667 = scalar_lea.sflag [#allocation3], 1
    %668 = vsyncpa %s667, 1

</llo_original>
